<compile_context>
chip_gen: v6e
topology: v6e:2x2x1
jax: 0.10.0
libtpu: 0.0.40
codegen_flags: <defaults>
</compile_context>

<pallas_src>
import functools

import jax
import jax.numpy as jnp
from jax.experimental import pallas as pl
from jax.experimental.pallas import tpu as pltpu

LANES = 128
SUBLANES = 8


def _round_up(x, m):
    return ((x + m - 1) // m) * m


# ----------------------------------------------------------------------------
# Pallas kernel: one GCN layer  out = [relu](A_hat @ (X @ W) + b)
# ----------------------------------------------------------------------------
def gcn_layer_kernel(a_ref, x_ref, w_ref, b_ref, o_ref, acc_ref, *, apply_relu):
    k = pl.program_id(1)

    @pl.when(k == 0)
    def _init():
        acc_ref[...] = jnp.zeros_like(acc_ref)

    # Per-k-block projection P = X[k] @ W on the MXU (bf16 in, f32 accumulate).
    # Recomputed once per row tile; invisible next to the HBM-bound A stream.
    p = jnp.dot(x_ref[...], w_ref[...], preferred_element_type=jnp.float32)

    # Aggregate with the bf16 adjacency tile on the MXU; accumulate in f32.
    acc_ref[...] += jnp.dot(a_ref[...], p.astype(jnp.bfloat16),
                            preferred_element_type=jnp.float32)

    @pl.when(k == pl.num_programs(1) - 1)
    def _finalize():
        h = acc_ref[...] + b_ref[...]          # f32 bias add on the VPU
        if apply_relu:
            h = jnp.maximum(h, 0.0)            # f32 ReLU on the VPU
        o_ref[...] = h.astype(o_ref.dtype)


def gcn_layer(a_bf16, x, w, b, *, apply_relu, out_dtype, tm, tk):
    """One GCNConv layer on the dense bf16 normalized adjacency, tiled."""
    n = a_bf16.shape[0]
    c_in = x.shape[1]
    c_out = w.shape[1]
    assert n % tm == 0 and n % tk == 0, "pad N to a multiple of the tile sizes"
    grid = (n // tm, n // tk)

    x_bytes = jnp.dtype(x.dtype).itemsize
    w_bytes = jnp.dtype(w.dtype).itemsize
    o_bytes = jnp.dtype(out_dtype).itemsize

    # Advisory cost estimate (A@P dominates; projection re-done per row tile).
    flops = 2 * n * n * c_out + 2 * (n // tm) * n * c_in * c_out
    bytes_accessed = (n * n * 2                        # A_hat (bf16), read once
                      + (n // tm) * n * c_in * x_bytes  # X blocks, re-read per row tile
                      + n * c_out * o_bytes             # output write
                      + c_in * c_out * w_bytes + c_out * 4)

    # VMEM budget from the actual resident (double-buffered) tiles + headroom;
    # stays well below physical VMEM on every chip (64 MiB v7x / 128 MiB v5e,v6e).
    vmem_bytes = (2 * tm * tk * 2                                        # A tiles
                  + 2 * tk * max(c_in, LANES) * x_bytes                  # X blocks
                  + 2 * max(c_in, SUBLANES) * max(c_out, LANES) * w_bytes  # W
                  + 2 * SUBLANES * max(c_out, LANES) * 4                 # b
                  + 2 * tm * max(c_out, LANES) * o_bytes                 # out tiles
                  + tm * max(c_out, LANES) * 4)                          # accumulator
    vmem_limit = min(vmem_bytes + (8 << 20), 48 << 20)

    kernel = functools.partial(gcn_layer_kernel, apply_relu=apply_relu)
    return pl.pallas_call(
        kernel,
        out_shape=jax.ShapeDtypeStruct((n, c_out), out_dtype),
        grid_spec=pltpu.PrefetchScalarGridSpec(
            num_scalar_prefetch=0,
            grid=grid,
            in_specs=[
                pl.BlockSpec((tm, tk), lambda i, k: (i, k)),       # A_hat tile
                pl.BlockSpec((tk, c_in), lambda i, k: (k, 0)),     # X column block
                pl.BlockSpec((c_in, c_out), lambda i, k: (0, 0)),  # W (resident)
                pl.BlockSpec((1, c_out), lambda i, k: (0, 0)),     # b (resident)
            ],
            out_specs=pl.BlockSpec((tm, c_out), lambda i, k: (i, 0)),
            scratch_shapes=[pltpu.VMEM((tm, c_out), jnp.float32)],
        ),
        compiler_params=pltpu.CompilerParams(
            dimension_semantics=("parallel", "arbitrary"),
            vmem_limit_bytes=vmem_limit,
        ),
        cost_estimate=pl.CostEstimate(flops=flops, transcendentals=0,
                                      bytes_accessed=bytes_accessed),
    )(a_bf16, x, w, b)


def centrality_gnn_forward(a_bf16, x_bf16, params, *, tm=128, tk=128):
    """3-layer GCN forward: conv3(relu(conv2(relu(conv1(x)))))."""
    w1, b1, w2, b2, w3, b3 = params   # weights bf16, biases f32

    h = gcn_layer(a_bf16, x_bf16, w1, b1, apply_relu=True,
                  out_dtype=jnp.bfloat16, tm=tm, tk=tk)
    # dropout(p=0.3) is identity in eval mode (self.training == False)
    # TODO(synk): training-mode dropout would use pltpu.prng_random_bits.
    h = gcn_layer(a_bf16, h, w2, b2, apply_relu=True,
                  out_dtype=jnp.bfloat16, tm=tm, tk=tk)

    # Final 1-wide head: pad to 128 lanes so the output store is lane-dense,
    # then slice column 0 back out.
    out_w = _round_up(w3.shape[1], LANES)
    w3p = jnp.zeros((w3.shape[0], out_w), w3.dtype).at[:, :w3.shape[1]].set(w3)
    b3p = jnp.zeros((1, out_w), b3.dtype).at[:, :b3.shape[1]].set(b3)
    h = gcn_layer(a_bf16, h, w3p, b3p, apply_relu=False,
                  out_dtype=jnp.float32, tm=tm, tk=tk)
    return h[:, :w3.shape[1]]


# ----------------------------------------------------------------------------
# Glue: GCN normalization (self-loops + symmetric deg^-1/2) -> dense A_hat.
# ----------------------------------------------------------------------------
def build_normalized_adjacency(edge_index, edge_weight, num_nodes, n_pad):
    src = edge_index[0]
    dst = edge_index[1]
    loop = jnp.arange(num_nodes, dtype=src.dtype)
    src = jnp.concatenate([src, loop])
    dst = jnp.concatenate([dst, loop])
    w = jnp.concatenate(
        [edge_weight, jnp.ones((num_nodes,), dtype=edge_weight.dtype)])

    deg = jnp.zeros((n_pad,), dtype=jnp.float32).at[dst].add(w)
    deg_inv_sqrt = jnp.where(deg > 0, jax.lax.rsqrt(deg), 0.0)   # keep in f32
    norm = deg_inv_sqrt[src] * w * deg_inv_sqrt[dst]

    # out[i] = sum over edges (j -> i) of norm * x[j]  =>  A_hat[i, j] += norm
    a_hat = jnp.zeros((n_pad, n_pad), dtype=jnp.float32)
    a_hat = a_hat.at[dst, src].add(norm)
    return a_hat


def init_params(key, in_channels, hidden_channels):
    """Deterministic glorot-style init matching GCNConv parameter shapes."""
    k1, k2, k3 = jax.random.split(key, 3)

    def glorot(k, fan_in, fan_out):
        limit = jnp.sqrt(6.0 / (fan_in + fan_out))
        return jax.random.uniform(k, (fan_in, fan_out), jnp.float32,
                                  -limit, limit)

    w1 = glorot(k1, in_channels, hidden_channels)
    b1 = jnp.zeros((1, hidden_channels), jnp.float32)
    w2 = glorot(k2, hidden_channels, hidden_channels)
    b2 = jnp.zeros((1, hidden_channels), jnp.float32)
    w3 = glorot(k3, hidden_channels, 1)
    b3 = jnp.zeros((1, 1), jnp.float32)
    return (w1, b1, w2, b2, w3, b3)


def gcn_reference(a_f32, x_f32, params_f32):
    """Plain-JAX f32 reference for a numerical sanity check."""
    w1, b1, w2, b2, w3, b3 = params_f32
    h = jnp.maximum(a_f32 @ (x_f32 @ w1) + b1, 0.0)
    h = jnp.maximum(a_f32 @ (h @ w2) + b2, 0.0)
    return a_f32 @ (h @ w3) + b3


if __name__ == "__main__":
    key = jax.random.PRNGKey(0)
    k_x, k_ei, k_ew, k_p = jax.random.split(key, 4)

    num_nodes = 200
    in_channels = 4
    hidden_channels = 32
    num_edges = 800
    tm = tk = 128          # 256-512 is the measured sweet spot at large N

    n_pad = _round_up(num_nodes, max(tm, tk))        # 256 -> grid (2, 2)
    c_in_pad = _round_up(in_channels, SUBLANES)      # pad tiny contraction dim

    # Node features [N, C_in]
    x = jax.random.normal(k_x, (num_nodes, in_channels), jnp.float32)
    # edge_index [2, E] (source row 0, target row 1)
    edge_index = jax.random.randint(k_ei, (2, num_edges), 0, num_nodes,
                                    dtype=jnp.int32)
    # edge_attr [E, 1]  (forward does edge_attr.view(-1))
    edge_attr = jax.random.uniform(k_ew, (num_edges, 1), jnp.float32, 0.1, 1.0)
    edge_weight = edge_attr.reshape(-1)

    params_f32 = init_params(k_p, in_channels, hidden_channels)
    w1, b1, w2, b2, w3, b3 = params_f32

    # Dense normalized adjacency, zero-padded to the tile grid, bf16 for the MXU.
    a_hat = build_normalized_adjacency(edge_index, edge_weight, num_nodes, n_pad)
    a_bf16 = a_hat.astype(jnp.bfloat16)

    # Zero-pad node rows to n_pad and the tiny input-channel dim to 8; stream
    # features and weights as bf16 (halves the non-A HBM traffic), biases f32.
    x_pad = jnp.zeros((n_pad, c_in_pad), jnp.float32)
    x_pad = x_pad.at[:num_nodes, :in_channels].set(x)
    w1_pad = jnp.zeros((c_in_pad, hidden_channels), jnp.float32)
    w1_pad = w1_pad.at[:in_channels].set(w1)

    x_bf16 = x_pad.astype(jnp.bfloat16)
    params = (w1_pad.astype(jnp.bfloat16), b1,
              w2.astype(jnp.bfloat16), b2,
              w3.astype(jnp.bfloat16), b3)

    fwd = jax.jit(functools.partial(centrality_gnn_forward, tm=tm, tk=tk))
    out_pad = fwd(a_bf16, x_bf16, params)
    out = out_pad[:num_nodes]
    jax.block_until_ready(out)

    assert out.shape == (num_nodes, 1) and out.dtype == jnp.float32

    # Sanity check against plain JAX (same bf16-quantized A/W/X, f32 math).
    ref_params = tuple(p.astype(jnp.float32) for p in params)
    ref = gcn_reference(a_bf16.astype(jnp.float32),
                        x_bf16.astype(jnp.float32), ref_params)[:num_nodes]
    max_err = float(jnp.max(jnp.abs(out - ref)))
    assert max_err < 0.1, f"max abs error too large: {max_err}"

    print("KERNEL_OK")
</pallas_src>

<mosaic_0001>
module attributes {stable_mosaic.version = 11 : i64} {
  func.func @gcn_layer_kernel(%arg0: i32, %arg1: i32, %arg2: memref<128x128xbf16, #tpu.memory_space<vmem>>, %arg3: memref<128x8xbf16, #tpu.memory_space<vmem>>, %arg4: memref<8x32xbf16, #tpu.memory_space<vmem>>, %arg5: memref<1x32xf32, #tpu.memory_space<vmem>>, %arg6: memref<128x32xbf16, #tpu.memory_space<vmem>>, %arg7: memref<128x32xf32, #tpu.memory_space<vmem>>) attributes {dimension_semantics = [#tpu.dimension_semantics<parallel>, #tpu.dimension_semantics<arbitrary>], iteration_bounds = array<i64: 2, 2>, scalar_prefetch = 0 : i64, scratch_operands = 1 : i64, tpu.core_type = #tpu.core_type<tc>, window_params = [{transform_indices = @transform_0, window_bounds = array<i64: 128, 128>}, {transform_indices = @transform_1, window_bounds = array<i64: 128, 8>}, {pipeline_mode = #tpu.pipeline_mode<synchronous>, transform_indices = @transform_2, window_bounds = array<i64: 8, 32>}, {pipeline_mode = #tpu.pipeline_mode<synchronous>, transform_indices = @transform_3, window_bounds = array<i64: 1, 32>}, {transform_indices = @transform_4, window_bounds = array<i64: 128, 32>}]} {
    %c0_i32 = arith.constant 0 : i32
    %0 = arith.cmpi eq, %arg1, %c0_i32 : i32
    %1 = arith.extui %0 : i1 to i32
    %c0_i32_0 = arith.constant 0 : i32
    %2 = arith.cmpi ne, %1, %c0_i32_0 : i32
    scf.if %2 {
      %cst_12 = arith.constant 0.000000e+00 : f32
      %15 = vector.broadcast %cst_12 : f32 to vector<128x32xf32>
      %c0_13 = arith.constant 0 : index
      %c0_14 = arith.constant 0 : index
      %16 = vector.load %arg7[%c0_13, %c0_14] : memref<128x32xf32, #tpu.memory_space<vmem>>, vector<128x32xf32>
      tpu.vector_store %arg7[%c0_13, %c0_14], %15 {strides = array<i32>} : memref<128x32xf32, #tpu.memory_space<vmem>>, vector<128x32xf32>,
    } else {
    }
    %c0 = arith.constant 0 : index
    %c0_1 = arith.constant 0 : index
    %3 = vector.load %arg3[%c0, %c0_1] : memref<128x8xbf16, #tpu.memory_space<vmem>>, vector<128x8xbf16>
    %c0_2 = arith.constant 0 : index
    %c0_3 = arith.constant 0 : index
    %4 = vector.load %arg4[%c0_2, %c0_3] : memref<8x32xbf16, #tpu.memory_space<vmem>>, vector<8x32xbf16>
    %cst = arith.constant dense<0.000000e+00> : vector<128x32xf32>
    %5 = tpu.matmul %3, %4, %cst {dimension_numbers = #tpu.dot_dimension_numbers<[1], [0], [0], [1], [0, 0, 1, 1], [], []>} : vector<128x8xbf16>, vector<8x32xbf16>, vector<128x32xf32> -> vector<128x32xf32>
    %c0_4 = arith.constant 0 : index
    %c0_5 = arith.constant 0 : index
    %6 = vector.load %arg7[%c0_4, %c0_5] : memref<128x32xf32, #tpu.memory_space<vmem>>, vector<128x32xf32>
    %c0_6 = arith.constant 0 : index
    %c0_7 = arith.constant 0 : index
    %7 = vector.load %arg2[%c0_6, %c0_7] : memref<128x128xbf16, #tpu.memory_space<vmem>>, vector<128x128xbf16>
    %8 = arith.truncf %5 : vector<128x32xf32> to vector<128x32xbf16>
    %cst_8 = arith.constant dense<0.000000e+00> : vector<128x32xf32>
    %9 = tpu.matmul %7, %8, %cst_8 {dimension_numbers = #tpu.dot_dimension_numbers<[1], [0], [0], [1], [0, 0, 1, 1], [], []>} : vector<128x128xbf16>, vector<128x32xbf16>, vector<128x32xf32> -> vector<128x32xf32>
    %10 = arith.addf %6, %9 : vector<128x32xf32>
    %c0_9 = arith.constant 0 : index
    %c0_10 = arith.constant 0 : index
    %11 = vector.load %arg7[%c0_9, %c0_10] : memref<128x32xf32, #tpu.memory_space<vmem>>, vector<128x32xf32>
    tpu.vector_store %arg7[%c0_9, %c0_10], %10 {strides = array<i32>} : memref<128x32xf32, #tpu.memory_space<vmem>>, vector<128x32xf32>,
    %c1_i32 = arith.constant 1 : i32
    %12 = arith.cmpi eq, %arg1, %c1_i32 : i32
    %13 = arith.extui %12 : i1 to i32
    %c0_i32_11 = arith.constant 0 : i32
    %14 = arith.cmpi ne, %13, %c0_i32_11 : i32
    scf.if %14 {
      %c0_12 = arith.constant 0 : index
      %c0_13 = arith.constant 0 : index
      %15 = vector.load %arg7[%c0_12, %c0_13] : memref<128x32xf32, #tpu.memory_space<vmem>>, vector<128x32xf32>
      %c0_14 = arith.constant 0 : index
      %c0_15 = arith.constant 0 : index
      %16 = vector.load %arg5[%c0_14, %c0_15] : memref<1x32xf32, #tpu.memory_space<vmem>>, vector<1x32xf32>
      %17 = vector.broadcast %16 : vector<1x32xf32> to vector<128x32xf32>
      %18 = arith.addf %15, %17 : vector<128x32xf32>
      %cst_16 = arith.constant 0.000000e+00 : f32
      %19 = vector.broadcast %cst_16 : f32 to vector<128x32xf32>
      %20 = arith.maximumf %18, %19 : vector<128x32xf32>
      %21 = arith.truncf %20 : vector<128x32xf32> to vector<128x32xbf16>
      %c0_17 = arith.constant 0 : index
      %c0_18 = arith.constant 0 : index
      %22 = vector.load %arg6[%c0_17, %c0_18] : memref<128x32xbf16, #tpu.memory_space<vmem>>, vector<128x32xbf16>
      tpu.vector_store %arg6[%c0_17, %c0_18], %21 {strides = array<i32>} : memref<128x32xbf16, #tpu.memory_space<vmem>>, vector<128x32xbf16>,
    } else {
    }
    return
  }
  func.func @transform_0(%arg0: i32, %arg1: i32) -> (i32, i32) {
    %c0_i32 = arith.constant 0 : i32
    return %arg0, %arg1 : i32, i32
  }
  func.func @transform_1(%arg0: i32, %arg1: i32) -> (i32, i32) {
    %c0_i32 = arith.constant 0 : i32
    %c0_i32_0 = arith.constant 0 : i32
    return %arg1, %c0_i32 : i32, i32
  }
  func.func @transform_2(%arg0: i32, %arg1: i32) -> (i32, i32) {
    %c0_i32 = arith.constant 0 : i32
    %c0_i32_0 = arith.constant 0 : i32
    %c0_i32_1 = arith.constant 0 : i32
    return %c0_i32, %c0_i32_0 : i32, i32
  }
  func.func @transform_3(%arg0: i32, %arg1: i32) -> (i32, i32) {
    %c0_i32 = arith.constant 0 : i32
    %c0_i32_0 = arith.constant 0 : i32
    %c0_i32_1 = arith.constant 0 : i32
    return %c0_i32, %c0_i32_0 : i32, i32
  }
  func.func @transform_4(%arg0: i32, %arg1: i32) -> (i32, i32) {
    %c0_i32 = arith.constant 0 : i32
    %c0_i32_0 = arith.constant 0 : i32
    return %arg0, %c0_i32 : i32, i32
  }
}

module attributes {stable_mosaic.version = 11 : i64} {
  func.func @gcn_layer_kernel(%arg0: i32, %arg1: i32, %arg2: memref<128x128xbf16, #tpu.memory_space<vmem>>, %arg3: memref<128x32xbf16, #tpu.memory_space<vmem>>, %arg4: memref<32x128xbf16, #tpu.memory_space<vmem>>, %arg5: memref<1x128xf32, #tpu.memory_space<vmem>>, %arg6: memref<128x128xf32, #tpu.memory_space<vmem>>, %arg7: memref<128x128xf32, #tpu.memory_space<vmem>>) attributes {dimension_semantics = [#tpu.dimension_semantics<parallel>, #tpu.dimension_semantics<arbitrary>], iteration_bounds = array<i64: 2, 2>, scalar_prefetch = 0 : i64, scratch_operands = 1 : i64, tpu.core_type = #tpu.core_type<tc>, window_params = [{transform_indices = @transform_0, window_bounds = array<i64: 128, 128>}, {transform_indices = @transform_1, window_bounds = array<i64: 128, 32>}, {pipeline_mode = #tpu.pipeline_mode<synchronous>, transform_indices = @transform_2, window_bounds = array<i64: 32, 128>}, {pipeline_mode = #tpu.pipeline_mode<synchronous>, transform_indices = @transform_3, window_bounds = array<i64: 1, 128>}, {transform_indices = @transform_4, window_bounds = array<i64: 128, 128>}]} {
    %c0_i32 = arith.constant 0 : i32
    %0 = arith.cmpi eq, %arg1, %c0_i32 : i32
    %1 = arith.extui %0 : i1 to i32
    %c0_i32_0 = arith.constant 0 : i32
    %2 = arith.cmpi ne, %1, %c0_i32_0 : i32
    scf.if %2 {
      %cst_12 = arith.constant 0.000000e+00 : f32
      %15 = vector.broadcast %cst_12 : f32 to vector<128x128xf32>
      %c0_13 = arith.constant 0 : index
      %c0_14 = arith.constant 0 : index
      %16 = vector.load %arg7[%c0_13, %c0_14] : memref<128x128xf32, #tpu.memory_space<vmem>>, vector<128x128xf32>
      tpu.vector_store %arg7[%c0_13, %c0_14], %15 {strides = array<i32>} : memref<128x128xf32, #tpu.memory_space<vmem>>, vector<128x128xf32>,
    } else {
    }
    %c0 = arith.constant 0 : index
    %c0_1 = arith.constant 0 : index
    %3 = vector.load %arg3[%c0, %c0_1] : memref<128x32xbf16, #tpu.memory_space<vmem>>, vector<128x32xbf16>
    %c0_2 = arith.constant 0 : index
    %c0_3 = arith.constant 0 : index
    %4 = vector.load %arg4[%c0_2, %c0_3] : memref<32x128xbf16, #tpu.memory_space<vmem>>, vector<32x128xbf16>
    %cst = arith.constant dense<0.000000e+00> : vector<128x128xf32>
    %5 = tpu.matmul %3, %4, %cst {dimension_numbers = #tpu.dot_dimension_numbers<[1], [0], [0], [1], [0, 0, 1, 1], [], []>} : vector<128x32xbf16>, vector<32x128xbf16>, vector<128x128xf32> -> vector<128x128xf32>
    %c0_4 = arith.constant 0 : index
    %c0_5 = arith.constant 0 : index
    %6 = vector.load %arg7[%c0_4, %c0_5] : memref<128x128xf32, #tpu.memory_space<vmem>>, vector<128x128xf32>
    %c0_6 = arith.constant 0 : index
    %c0_7 = arith.constant 0 : index
    %7 = vector.load %arg2[%c0_6, %c0_7] : memref<128x128xbf16, #tpu.memory_space<vmem>>, vector<128x128xbf16>
    %8 = arith.truncf %5 : vector<128x128xf32> to vector<128x128xbf16>
    %cst_8 = arith.constant dense<0.000000e+00> : vector<128x128xf32>
    %9 = tpu.matmul %7, %8, %cst_8 {dimension_numbers = #tpu.dot_dimension_numbers<[1], [0], [0], [1], [0, 0, 1, 1], [], []>} : vector<128x128xbf16>, vector<128x128xbf16>, vector<128x128xf32> -> vector<128x128xf32>
    %10 = arith.addf %6, %9 : vector<128x128xf32>
    %c0_9 = arith.constant 0 : index
    %c0_10 = arith.constant 0 : index
    %11 = vector.load %arg7[%c0_9, %c0_10] : memref<128x128xf32, #tpu.memory_space<vmem>>, vector<128x128xf32>
    tpu.vector_store %arg7[%c0_9, %c0_10], %10 {strides = array<i32>} : memref<128x128xf32, #tpu.memory_space<vmem>>, vector<128x128xf32>,
    %c1_i32 = arith.constant 1 : i32
    %12 = arith.cmpi eq, %arg1, %c1_i32 : i32
    %13 = arith.extui %12 : i1 to i32
    %c0_i32_11 = arith.constant 0 : i32
    %14 = arith.cmpi ne, %13, %c0_i32_11 : i32
    scf.if %14 {
      %c0_12 = arith.constant 0 : index
      %c0_13 = arith.constant 0 : index
      %15 = vector.load %arg7[%c0_12, %c0_13] : memref<128x128xf32, #tpu.memory_space<vmem>>, vector<128x128xf32>
      %c0_14 = arith.constant 0 : index
      %c0_15 = arith.constant 0 : index
      %16 = vector.load %arg5[%c0_14, %c0_15] : memref<1x128xf32, #tpu.memory_space<vmem>>, vector<1x128xf32>
      %17 = vector.broadcast %16 : vector<1x128xf32> to vector<128x128xf32>
      %18 = arith.addf %15, %17 : vector<128x128xf32>
      %c0_16 = arith.constant 0 : index
      %c0_17 = arith.constant 0 : index
      %19 = vector.load %arg6[%c0_16, %c0_17] : memref<128x128xf32, #tpu.memory_space<vmem>>, vector<128x128xf32>
      tpu.vector_store %arg6[%c0_16, %c0_17], %18 {strides = array<i32>} : memref<128x128xf32, #tpu.memory_space<vmem>>, vector<128x128xf32>,
    } else {
    }
    return
  }
  func.func @transform_0(%arg0: i32, %arg1: i32) -> (i32, i32) {
    %c0_i32 = arith.constant 0 : i32
    return %arg0, %arg1 : i32, i32
  }
  func.func @transform_1(%arg0: i32, %arg1: i32) -> (i32, i32) {
    %c0_i32 = arith.constant 0 : i32
    %c0_i32_0 = arith.constant 0 : i32
    return %arg1, %c0_i32 : i32, i32
  }
  func.func @transform_2(%arg0: i32, %arg1: i32) -> (i32, i32) {
    %c0_i32 = arith.constant 0 : i32
    %c0_i32_0 = arith.constant 0 : i32
    %c0_i32_1 = arith.constant 0 : i32
    return %c0_i32, %c0_i32_0 : i32, i32
  }
  func.func @transform_3(%arg0: i32, %arg1: i32) -> (i32, i32) {
    %c0_i32 = arith.constant 0 : i32
    %c0_i32_0 = arith.constant 0 : i32
    %c0_i32_1 = arith.constant 0 : i32
    return %c0_i32, %c0_i32_0 : i32, i32
  }
  func.func @transform_4(%arg0: i32, %arg1: i32) -> (i32, i32) {
    %c0_i32 = arith.constant 0 : i32
    %c0_i32_0 = arith.constant 0 : i32
    return %arg0, %c0_i32 : i32, i32
  }
}

module attributes {stable_mosaic.version = 11 : i64} {
  func.func @gcn_layer_kernel(%arg0: i32, %arg1: i32, %arg2: memref<128x128xbf16, #tpu.memory_space<vmem>>, %arg3: memref<128x32xbf16, #tpu.memory_space<vmem>>, %arg4: memref<32x32xbf16, #tpu.memory_space<vmem>>, %arg5: memref<1x32xf32, #tpu.memory_space<vmem>>, %arg6: memref<128x32xbf16, #tpu.memory_space<vmem>>, %arg7: memref<128x32xf32, #tpu.memory_space<vmem>>) attributes {dimension_semantics = [#tpu.dimension_semantics<parallel>, #tpu.dimension_semantics<arbitrary>], iteration_bounds = array<i64: 2, 2>, scalar_prefetch = 0 : i64, scratch_operands = 1 : i64, tpu.core_type = #tpu.core_type<tc>, window_params = [{transform_indices = @transform_0, window_bounds = array<i64: 128, 128>}, {transform_indices = @transform_1, window_bounds = array<i64: 128, 32>}, {pipeline_mode = #tpu.pipeline_mode<synchronous>, transform_indices = @transform_2, window_bounds = array<i64: 32, 32>}, {pipeline_mode = #tpu.pipeline_mode<synchronous>, transform_indices = @transform_3, window_bounds = array<i64: 1, 32>}, {transform_indices = @transform_4, window_bounds = array<i64: 128, 32>}]} {
    %c0_i32 = arith.constant 0 : i32
    %0 = arith.cmpi eq, %arg1, %c0_i32 : i32
    %1 = arith.extui %0 : i1 to i32
    %c0_i32_0 = arith.constant 0 : i32
    %2 = arith.cmpi ne, %1, %c0_i32_0 : i32
    scf.if %2 {
      %cst_12 = arith.constant 0.000000e+00 : f32
      %15 = vector.broadcast %cst_12 : f32 to vector<128x32xf32>
      %c0_13 = arith.constant 0 : index
      %c0_14 = arith.constant 0 : index
      %16 = vector.load %arg7[%c0_13, %c0_14] : memref<128x32xf32, #tpu.memory_space<vmem>>, vector<128x32xf32>
      tpu.vector_store %arg7[%c0_13, %c0_14], %15 {strides = array<i32>} : memref<128x32xf32, #tpu.memory_space<vmem>>, vector<128x32xf32>,
    } else {
    }
    %c0 = arith.constant 0 : index
    %c0_1 = arith.constant 0 : index
    %3 = vector.load %arg3[%c0, %c0_1] : memref<128x32xbf16, #tpu.memory_space<vmem>>, vector<128x32xbf16>
    %c0_2 = arith.constant 0 : index
    %c0_3 = arith.constant 0 : index
    %4 = vector.load %arg4[%c0_2, %c0_3] : memref<32x32xbf16, #tpu.memory_space<vmem>>, vector<32x32xbf16>
    %cst = arith.constant dense<0.000000e+00> : vector<128x32xf32>
    %5 = tpu.matmul %3, %4, %cst {dimension_numbers = #tpu.dot_dimension_numbers<[1], [0], [0], [1], [0, 0, 1, 1], [], []>} : vector<128x32xbf16>, vector<32x32xbf16>, vector<128x32xf32> -> vector<128x32xf32>
    %c0_4 = arith.constant 0 : index
    %c0_5 = arith.constant 0 : index
    %6 = vector.load %arg7[%c0_4, %c0_5] : memref<128x32xf32, #tpu.memory_space<vmem>>, vector<128x32xf32>
    %c0_6 = arith.constant 0 : index
    %c0_7 = arith.constant 0 : index
    %7 = vector.load %arg2[%c0_6, %c0_7] : memref<128x128xbf16, #tpu.memory_space<vmem>>, vector<128x128xbf16>
    %8 = arith.truncf %5 : vector<128x32xf32> to vector<128x32xbf16>
    %cst_8 = arith.constant dense<0.000000e+00> : vector<128x32xf32>
    %9 = tpu.matmul %7, %8, %cst_8 {dimension_numbers = #tpu.dot_dimension_numbers<[1], [0], [0], [1], [0, 0, 1, 1], [], []>} : vector<128x128xbf16>, vector<128x32xbf16>, vector<128x32xf32> -> vector<128x32xf32>
    %10 = arith.addf %6, %9 : vector<128x32xf32>
    %c0_9 = arith.constant 0 : index
    %c0_10 = arith.constant 0 : index
    %11 = vector.load %arg7[%c0_9, %c0_10] : memref<128x32xf32, #tpu.memory_space<vmem>>, vector<128x32xf32>
    tpu.vector_store %arg7[%c0_9, %c0_10], %10 {strides = array<i32>} : memref<128x32xf32, #tpu.memory_space<vmem>>, vector<128x32xf32>,
    %c1_i32 = arith.constant 1 : i32
    %12 = arith.cmpi eq, %arg1, %c1_i32 : i32
    %13 = arith.extui %12 : i1 to i32
    %c0_i32_11 = arith.constant 0 : i32
    %14 = arith.cmpi ne, %13, %c0_i32_11 : i32
    scf.if %14 {
      %c0_12 = arith.constant 0 : index
      %c0_13 = arith.constant 0 : index
      %15 = vector.load %arg7[%c0_12, %c0_13] : memref<128x32xf32, #tpu.memory_space<vmem>>, vector<128x32xf32>
      %c0_14 = arith.constant 0 : index
      %c0_15 = arith.constant 0 : index
      %16 = vector.load %arg5[%c0_14, %c0_15] : memref<1x32xf32, #tpu.memory_space<vmem>>, vector<1x32xf32>
      %17 = vector.broadcast %16 : vector<1x32xf32> to vector<128x32xf32>
      %18 = arith.addf %15, %17 : vector<128x32xf32>
      %cst_16 = arith.constant 0.000000e+00 : f32
      %19 = vector.broadcast %cst_16 : f32 to vector<128x32xf32>
      %20 = arith.maximumf %18, %19 : vector<128x32xf32>
      %21 = arith.truncf %20 : vector<128x32xf32> to vector<128x32xbf16>
      %c0_17 = arith.constant 0 : index
      %c0_18 = arith.constant 0 : index
      %22 = vector.load %arg6[%c0_17, %c0_18] : memref<128x32xbf16, #tpu.memory_space<vmem>>, vector<128x32xbf16>
      tpu.vector_store %arg6[%c0_17, %c0_18], %21 {strides = array<i32>} : memref<128x32xbf16, #tpu.memory_space<vmem>>, vector<128x32xbf16>,
    } else {
    }
    return
  }
  func.func @transform_0(%arg0: i32, %arg1: i32) -> (i32, i32) {
    %c0_i32 = arith.constant 0 : i32
    return %arg0, %arg1 : i32, i32
  }
  func.func @transform_1(%arg0: i32, %arg1: i32) -> (i32, i32) {
    %c0_i32 = arith.constant 0 : i32
    %c0_i32_0 = arith.constant 0 : i32
    return %arg1, %c0_i32 : i32, i32
  }
  func.func @transform_2(%arg0: i32, %arg1: i32) -> (i32, i32) {
    %c0_i32 = arith.constant 0 : i32
    %c0_i32_0 = arith.constant 0 : i32
    %c0_i32_1 = arith.constant 0 : i32
    return %c0_i32, %c0_i32_0 : i32, i32
  }
  func.func @transform_3(%arg0: i32, %arg1: i32) -> (i32, i32) {
    %c0_i32 = arith.constant 0 : i32
    %c0_i32_0 = arith.constant 0 : i32
    %c0_i32_1 = arith.constant 0 : i32
    return %c0_i32, %c0_i32_0 : i32, i32
  }
  func.func @transform_4(%arg0: i32, %arg1: i32) -> (i32, i32) {
    %c0_i32 = arith.constant 0 : i32
    %c0_i32_0 = arith.constant 0 : i32
    return %arg0, %c0_i32 : i32, i32
  }
}

</mosaic_0001>

<llo_original>
// kernel: centrality_gnn_forward.5
$region0: #{centrality_gnn_forward.5}
  #allocation0 [shape = 'u32[]', space=smem, size = 0x4, offset = 0x4, fixed_abs, tag = 'smem constant byte address 0x4 - core index']
  #allocation1 [shape = 'u32[144,128]{1,0:T(1,128)}', space=vmem, size = 0x12000, scoped, tag = 'internal scratch']
  #allocation2 [shape = 'f32[128,128]{1,0:T(8,128)}', space=vmem, size = 0x10000, scoped, tag = 'scratch operand']
  %s0 = inlined_call_operand.vmem [shape: bf16[256,256], index: 0, kind: input, shape index: {}]
  %s1 = inlined_call_operand.vmem [shape: bf16[256,32], index: 1, kind: input, shape index: {}]
  %s2 = inlined_call_operand.vmem [shape: bf16[32,128], index: 2, kind: input, shape index: {}]
  %s3 = inlined_call_operand.vmem [shape: f32[1,128], index: 3, kind: input, shape index: {}]
  %s4 = inlined_call_operand.vmem [shape: f32[256,128], index: 4, kind: output, shape index: {}]
  %s5 = sld [smem:[#allocation0]]
  $region98: #{centrality_gnn_forward.5} parent=0
    _
  %s7 = ssub.s32 1, %s5
  %s8 = scalar_select 0, %s7, %s5
  $region1: #{centrality_gnn_forward.5} parent=0
    #allocation3 [shape = 'u8[65536]{0}', space=vmem, size = 0x10000, scoped, tag = 'input window, operand 0']
    loop: start=0, step=1, limit=6
    $region2: #{centrality_gnn_forward.5} parent=1 // loop_pre_header
      _
    $region3: #{centrality_gnn_forward.5} parent=1 // loop_header
      %s10 = sphi 0, %s14
      %p11 = scmp.ge.s32.totalorder %s10, 6
      %s17 = sphi 0, %s29
      %s18 = sphi 0, %s25
      %s19 = sphi 0, %s17
      %s20 = sphi 0, %s18
      %s21 = sphi 0, %s19
      %s22 = sphi 0, %s20
      %s34 = sphi 0, %s36
      %s37 = sphi 0, %s34
      %s38 = sphi 0, %s37
      %s54 = sphi 0, %s38
      %s60 = sphi 0, %s62
      %s63 = sphi 0, %s60
      %s64 = sphi 0, %s63
      %s80 = sphi 0, %s64
      %s84 = sphi 0, %s84
      %s86 = sphi 0, %s84
      %s87 = sphi 0, %s86
      %s101 = sphi 0, %s87
      %s105 = sphi 0, %s105
      %s107 = sphi 0, %s105
      %s108 = sphi 0, %s107
      %s122 = sphi 0, %s108
      %s128 = sphi 0, %s130
      %s131 = sphi 0, %s128
      %s132 = sphi 0, %s131
      %s148 = sphi 0, %s132
    $region4: #{centrality_gnn_forward.5} parent=1 // loop_header_branch
      %13 = sbr.rel (%p11) target = $region8
    $region5: #{centrality_gnn_forward.5} parent=1 // loop_body
      %s15 = ssub.s32 %s10, 1
      %s16 = ssub.s32 %s10, 2
      %s23 = sadd.s32 1, %s18
      %p24 = scmp.ge.s32.totalorder %s23, 2
      %s25 = scalar_select %p24, 0, %s23
      %s26 = sadd.s32 1, %s17
      %s27 = scalar_select %p24, %s26, %s17
      %p28 = scmp.ge.s32.totalorder %s27, 2
      %s29 = scalar_select %p28, 0, %s27
      %s30 = ssub.s32 %s17, %s29
      %s31 = ssub.s32 %s18, %s25
      %s32 = sor.u32 %s30, %s31
      %p33 = scmp.eq.s32.totalorder %s32, 0
      %s35 = sadd.s32 %s34, 1
      %s36 = scalar_select %p33, %s34, %s35
      %p39 = pneg %p33
      %p40 = scmp.eq.s32.totalorder %s10, 3
      %p41 = por %p39, %p40
      %p42 = scmp.ne.s32.totalorder %s34, %s37
      %p43 = scmp.eq.s32.totalorder %s10, 0
      %p44 = por %p42, %p43
      %p45 = scmp.ne.s32.totalorder %s34, %s37
      %p46 = scmp.eq.s32.totalorder %s15, 3
      %p47 = por %p45, %p46
      %p48 = scmp.ne.s32.totalorder %s37, %s38
      %p49 = scmp.eq.s32.totalorder %s15, 0
      %p50 = por %p48, %p49
      %p51 = scmp.ne.s32.totalorder %s37, %s38
      %p52 = scmp.eq.s32.totalorder %s16, 3
      %p53 = por %p51, %p52
      %p55 = scmp.ne.s32.totalorder %s38, %s54
      %p56 = scmp.eq.s32.totalorder %s16, 0
      %p57 = por %p55, %p56
      %s58 = ssub.s32 %s18, %s25
      %p59 = scmp.eq.s32.totalorder %s58, 0
      %s61 = sadd.s32 %s60, 1
      %s62 = scalar_select %p59, %s60, %s61
      %p65 = pneg %p59
      %p66 = scmp.eq.s32.totalorder %s10, 3
      %p67 = por %p65, %p66
      %p68 = scmp.ne.s32.totalorder %s60, %s63
      %p69 = scmp.eq.s32.totalorder %s10, 0
      %p70 = por %p68, %p69
      %p71 = scmp.ne.s32.totalorder %s60, %s63
      %p72 = scmp.eq.s32.totalorder %s15, 3
      %p73 = por %p71, %p72
      %p74 = scmp.ne.s32.totalorder %s63, %s64
      %p75 = scmp.eq.s32.totalorder %s15, 0
      %p76 = por %p74, %p75
      %p77 = scmp.ne.s32.totalorder %s63, %s64
      %p78 = scmp.eq.s32.totalorder %s16, 3
      %p79 = por %p77, %p78
      %p81 = scmp.ne.s32.totalorder %s64, %s80
      %p82 = scmp.eq.s32.totalorder %s16, 0
      %p83 = por %p81, %p82
      %s85 = sadd.s32 %s84, 1
      %p88 = scmp.eq.s32.totalorder %s10, 3
      %p89 = scmp.ne.s32.totalorder %s84, %s86
      %p90 = scmp.eq.s32.totalorder %s10, 0
      %p91 = por %p89, %p90
      %p92 = scmp.ne.s32.totalorder %s84, %s86
      %p93 = scmp.eq.s32.totalorder %s15, 3
      %p94 = por %p92, %p93
      %p95 = scmp.ne.s32.totalorder %s86, %s87
      %p96 = scmp.eq.s32.totalorder %s15, 0
      %p97 = por %p95, %p96
      %p98 = scmp.ne.s32.totalorder %s86, %s87
      %p99 = scmp.eq.s32.totalorder %s16, 3
      %p100 = por %p98, %p99
      %p102 = scmp.ne.s32.totalorder %s87, %s101
      %p103 = scmp.eq.s32.totalorder %s16, 0
      %p104 = por %p102, %p103
      %s106 = sadd.s32 %s105, 1
      %p109 = scmp.eq.s32.totalorder %s10, 3
      %p110 = scmp.ne.s32.totalorder %s105, %s107
      %p111 = scmp.eq.s32.totalorder %s10, 0
      %p112 = por %p110, %p111
      %p113 = scmp.ne.s32.totalorder %s105, %s107
      %p114 = scmp.eq.s32.totalorder %s15, 3
      %p115 = por %p113, %p114
      %p116 = scmp.ne.s32.totalorder %s107, %s108
      %p117 = scmp.eq.s32.totalorder %s15, 0
      %p118 = por %p116, %p117
      %p119 = scmp.ne.s32.totalorder %s107, %s108
      %p120 = scmp.eq.s32.totalorder %s16, 3
      %p121 = por %p119, %p120
      %p123 = scmp.ne.s32.totalorder %s108, %s122
      %p124 = scmp.eq.s32.totalorder %s16, 0
      %p125 = por %p123, %p124
      %s126 = ssub.s32 %s17, %s29
      %p127 = scmp.eq.s32.totalorder %s126, 0
      %s129 = sadd.s32 %s128, 1
      %s130 = scalar_select %p127, %s128, %s129
      %p133 = pneg %p127
      %p134 = scmp.eq.s32.totalorder %s10, 3
      %p135 = por %p133, %p134
      %p136 = scmp.ne.s32.totalorder %s128, %s131
      %p137 = scmp.eq.s32.totalorder %s10, 0
      %p138 = por %p136, %p137
      %p139 = scmp.ne.s32.totalorder %s128, %s131
      %p140 = scmp.eq.s32.totalorder %s15, 3
      %p141 = por %p139, %p140
      %p142 = scmp.ne.s32.totalorder %s131, %s132
      %p143 = scmp.eq.s32.totalorder %s15, 0
      %p144 = por %p142, %p143
      %p145 = scmp.ne.s32.totalorder %s131, %s132
      %p146 = scmp.eq.s32.totalorder %s16, 3
      %p147 = por %p145, %p146
      %p149 = scmp.ne.s32.totalorder %s132, %s148
      %p150 = scmp.eq.s32.totalorder %s16, 0
      %p151 = por %p149, %p150
      %p152 = scmp.le.s32.totalorder 1, %s10
      %p153 = scmp.lt.s32.totalorder %s10, 5
      %p154 = pnand %p152, %p153
      %p155 = pneg %p154
      // Predicated region
      $region9: #{centrality_gnn_forward.5} parent=5 // pred_check
        _
      $region10: #{centrality_gnn_forward.5} parent=5 // pred_check_branch
        %157 = sbr.rel (%p154) target = $region12
      $region11: #{centrality_gnn_forward.5} parent=5 // pred_region
        %s158 = ssub.s32 %s10, 1
        // Predicated region
        $region13: #{centrality_gnn_forward.5} parent=11 // pred_check
          %p159 = pneg %p97
        $region14: #{centrality_gnn_forward.5} parent=11 // pred_check_branch
          %161 = sbr.rel (%p159) target = $region16
        $region15: #{centrality_gnn_forward.5} parent=11 // pred_region
          _
        $region16: #{centrality_gnn_forward.5} parent=11 // pred_fallthru
          _
        // Predicated region
        $region17: #{centrality_gnn_forward.5} parent=11 // pred_check
          %p162 = pneg %p118
        $region18: #{centrality_gnn_forward.5} parent=11 // pred_check_branch
          %164 = sbr.rel (%p162) target = $region20
        $region19: #{centrality_gnn_forward.5} parent=11 // pred_region
          _
        $region20: #{centrality_gnn_forward.5} parent=11 // pred_fallthru
          _
      $region12: #{centrality_gnn_forward.5} parent=5 // pred_fallthru
        _
      %p165 = scmp.lt.s32.totalorder %s10, 4
      // Predicated region
      $region21: #{centrality_gnn_forward.5} parent=5 // pred_check
        %p166 = pneg %p165
      $region22: #{centrality_gnn_forward.5} parent=5 // pred_check_branch
        %168 = sbr.rel (%p166) target = $region24
      $region23: #{centrality_gnn_forward.5} parent=5 // pred_region
        // Predicated region
        $region25: #{centrality_gnn_forward.5} parent=23 // pred_check
          %p169 = pneg %p44
        $region26: #{centrality_gnn_forward.5} parent=23 // pred_check_branch
          %171 = sbr.rel (%p169) target = $region28
        $region27: #{centrality_gnn_forward.5} parent=23 // pred_region
          %s172 = sand.u32 %s34, 1
          %s173 = sand.u32 %s34, 1
          %s174 = smul.addr %s173, 64
          %s175 = scalar_lea.vmem [#allocation3], %s174
          %s176 = smul.u32 16, %s17
          %s177 = smul.addr %s176, 2
          %s178 = sadd.s32 %s18, %s177
          %s179 = smul.addr %s178, 4
          %s180 = scalar_lea.vmem %s0, %s179
          // Predicated region
          $region29: #{centrality_gnn_forward.5} parent=27 // pred_check
            _
          $region30: #{centrality_gnn_forward.5} parent=27 // pred_check_branch
            %182 = sbr.rel (0) target = $region32
          $region31: #{centrality_gnn_forward.5} parent=27 // pred_region
            // Predicated region
            $region33: #{centrality_gnn_forward.5} parent=31 // pred_check
              _
            $region34: #{centrality_gnn_forward.5} parent=31 // pred_check_branch
              %184 = sbr.rel target = $region36
            $region35: #{centrality_gnn_forward.5} parent=31 // pred_region
              // Predicated region
              $region48: #{centrality_gnn_forward.5} parent=35 // pred_check
                _
              $region49: #{centrality_gnn_forward.5} parent=35 // pred_check_branch
                %230 = sbr.rel (0) target = $region51
              $region50: #{centrality_gnn_forward.5} parent=35 // pred_region
                loop: start=0, step=1, limit=1
                $region52: #{centrality_gnn_forward.5} parent=50 // loop_pre_header
                  _
                $region53: #{centrality_gnn_forward.5} parent=50 // loop_header
                  %s232 = sphi 0, %s236
                  %p233 = scmp.ge.s32.totalorder %s232, 1
                  %s237 = sphi %s180, %s180
                  %s238 = sphi %s175, %s175
                $region54: #{centrality_gnn_forward.5} parent=50 // loop_header_branch
                  %235 = sbr.rel (%p233) target = $region58
                $region55: #{centrality_gnn_forward.5} parent=50 // loop_body
                  _
                $region56: #{centrality_gnn_forward.5} parent=50 // loop_footer
                  %s236 = sadd.s32 1, %s232
                $region57: #{centrality_gnn_forward.5} parent=50 // loop_footer_branch
                  %231 = sbr.rel target = $region53
                $region58: #{centrality_gnn_forward.5} parent=50 // loop_exit
                  _
                %s240 = ssub.s32 16, 1
                loop: start=0, step=1, limit=1
                $region59: #{centrality_gnn_forward.5} parent=50 // loop_pre_header
                  _
                $region60: #{centrality_gnn_forward.5} parent=50 // loop_header
                  %s242 = sphi 0, %s246
                  %p243 = scmp.ge.s32.totalorder %s242, 1
                  %s247 = sphi %s180, %s180
                  %s248 = sphi %s175, %s175
                $region61: #{centrality_gnn_forward.5} parent=50 // loop_header_branch
                  %245 = sbr.rel (%p243) target = $region65
                $region62: #{centrality_gnn_forward.5} parent=50 // loop_body
                  %v249 = vld [vmem:[%s247] sm:%s240]
                  %250 = vst [vmem:[%s248] sm:%s240] %v249
                  %v251 = vld [vmem:[%s247 + $0x8] sm:%s240]
                  %252 = vst [vmem:[%s248 + $0x4] sm:%s240] %v251
                  %v253 = vld [vmem:[%s247 + $0x10] sm:%s240]
                  %254 = vst [vmem:[%s248 + $0x8] sm:%s240] %v253
                  %v255 = vld [vmem:[%s247 + $0x18] sm:%s240]
                  %256 = vst [vmem:[%s248 + $0xc] sm:%s240] %v255
                  %v257 = vld [vmem:[%s247 + $0x20] sm:%s240]
                  %258 = vst [vmem:[%s248 + $0x10] sm:%s240] %v257
                  %v259 = vld [vmem:[%s247 + $0x28] sm:%s240]
                  %260 = vst [vmem:[%s248 + $0x14] sm:%s240] %v259
                  %v261 = vld [vmem:[%s247 + $0x30] sm:%s240]
                  %262 = vst [vmem:[%s248 + $0x18] sm:%s240] %v261
                  %v263 = vld [vmem:[%s247 + $0x38] sm:%s240]
                  %264 = vst [vmem:[%s248 + $0x1c] sm:%s240] %v263
                  %v265 = vld [vmem:[%s247 + $0x40] sm:%s240]
                  %266 = vst [vmem:[%s248 + $0x20] sm:%s240] %v265
                  %v267 = vld [vmem:[%s247 + $0x48] sm:%s240]
                  %268 = vst [vmem:[%s248 + $0x24] sm:%s240] %v267
                  %v269 = vld [vmem:[%s247 + $0x50] sm:%s240]
                  %270 = vst [vmem:[%s248 + $0x28] sm:%s240] %v269
                  %v271 = vld [vmem:[%s247 + $0x58] sm:%s240]
                  %272 = vst [vmem:[%s248 + $0x2c] sm:%s240] %v271
                  %v273 = vld [vmem:[%s247 + $0x60] sm:%s240]
                  %274 = vst [vmem:[%s248 + $0x30] sm:%s240] %v273
                  %v275 = vld [vmem:[%s247 + $0x68] sm:%s240]
                  %276 = vst [vmem:[%s248 + $0x34] sm:%s240] %v275
                  %v277 = vld [vmem:[%s247 + $0x70] sm:%s240]
                  %278 = vst [vmem:[%s248 + $0x38] sm:%s240] %v277
                  %v279 = vld [vmem:[%s247 + $0x78] sm:%s240]
                  %280 = vst [vmem:[%s248 + $0x3c] sm:%s240] %v279
                $region63: #{centrality_gnn_forward.5} parent=50 // loop_footer
                  %s246 = sadd.s32 1, %s242
                $region64: #{centrality_gnn_forward.5} parent=50 // loop_footer_branch
                  %241 = sbr.rel target = $region60
                $region65: #{centrality_gnn_forward.5} parent=50 // loop_exit
                  _
              $region51: #{centrality_gnn_forward.5} parent=35 // pred_fallthru
                _
            $region36: #{centrality_gnn_forward.5} parent=31 // pred_fallthru
              _
            // Predicated region
            $region37: #{centrality_gnn_forward.5} parent=31 // pred_check
              _
            $region38: #{centrality_gnn_forward.5} parent=31 // pred_check_branch
              %186 = sbr.rel (0) target = $region40
            $region39: #{centrality_gnn_forward.5} parent=31 // pred_region
              %s188 = ssub.s32 16, 1
              loop: start=0, step=1, limit=1
              $region41: #{centrality_gnn_forward.5} parent=39 // loop_pre_header
                _
              $region42: #{centrality_gnn_forward.5} parent=39 // loop_header
                %s190 = sphi 0, %s194
                %p191 = scmp.ge.s32.totalorder %s190, 1
                %s195 = sphi %s180, %s180
                %s196 = sphi %s175, %s175
              $region43: #{centrality_gnn_forward.5} parent=39 // loop_header_branch
                %193 = sbr.rel (%p191) target = $region47
              $region44: #{centrality_gnn_forward.5} parent=39 // loop_body
                %v197 = vld [vmem:[%s195] sm:%s188]
                %198 = vst [vmem:[%s196] sm:%s188] %v197
                %v199 = vld [vmem:[%s195 + $0x8] sm:%s188]
                %200 = vst [vmem:[%s196 + $0x4] sm:%s188] %v199
                %v201 = vld [vmem:[%s195 + $0x10] sm:%s188]
                %202 = vst [vmem:[%s196 + $0x8] sm:%s188] %v201
                %v203 = vld [vmem:[%s195 + $0x18] sm:%s188]
                %204 = vst [vmem:[%s196 + $0xc] sm:%s188] %v203
                %v205 = vld [vmem:[%s195 + $0x20] sm:%s188]
                %206 = vst [vmem:[%s196 + $0x10] sm:%s188] %v205
                %v207 = vld [vmem:[%s195 + $0x28] sm:%s188]
                %208 = vst [vmem:[%s196 + $0x14] sm:%s188] %v207
                %v209 = vld [vmem:[%s195 + $0x30] sm:%s188]
                %210 = vst [vmem:[%s196 + $0x18] sm:%s188] %v209
                %v211 = vld [vmem:[%s195 + $0x38] sm:%s188]
                %212 = vst [vmem:[%s196 + $0x1c] sm:%s188] %v211
                %v213 = vld [vmem:[%s195 + $0x40] sm:%s188]
                %214 = vst [vmem:[%s196 + $0x20] sm:%s188] %v213
                %v215 = vld [vmem:[%s195 + $0x48] sm:%s188]
                %216 = vst [vmem:[%s196 + $0x24] sm:%s188] %v215
                %v217 = vld [vmem:[%s195 + $0x50] sm:%s188]
                %218 = vst [vmem:[%s196 + $0x28] sm:%s188] %v217
                %v219 = vld [vmem:[%s195 + $0x58] sm:%s188]
                %220 = vst [vmem:[%s196 + $0x2c] sm:%s188] %v219
                %v221 = vld [vmem:[%s195 + $0x60] sm:%s188]
                %222 = vst [vmem:[%s196 + $0x30] sm:%s188] %v221
                %v223 = vld [vmem:[%s195 + $0x68] sm:%s188]
                %224 = vst [vmem:[%s196 + $0x34] sm:%s188] %v223
                %v225 = vld [vmem:[%s195 + $0x70] sm:%s188]
                %226 = vst [vmem:[%s196 + $0x38] sm:%s188] %v225
                %v227 = vld [vmem:[%s195 + $0x78] sm:%s188]
                %228 = vst [vmem:[%s196 + $0x3c] sm:%s188] %v227
              $region45: #{centrality_gnn_forward.5} parent=39 // loop_footer
                %s194 = sadd.s32 1, %s190
              $region46: #{centrality_gnn_forward.5} parent=39 // loop_footer_branch
                %189 = sbr.rel target = $region42
              $region47: #{centrality_gnn_forward.5} parent=39 // loop_exit
                _
            $region40: #{centrality_gnn_forward.5} parent=31 // pred_fallthru
              _
          $region32: #{centrality_gnn_forward.5} parent=27 // pred_fallthru
            _
          %281 = vnop
        $region28: #{centrality_gnn_forward.5} parent=23 // pred_fallthru
          _
        // Predicated region
        $region66: #{centrality_gnn_forward.5} parent=23 // pred_check
          %p282 = pneg %p70
        $region67: #{centrality_gnn_forward.5} parent=23 // pred_check_branch
          %284 = sbr.rel (%p282) target = $region69
        $region68: #{centrality_gnn_forward.5} parent=23 // pred_region
          %s285 = smul.u32 16, %s18
          %p286 = scmp.lt.s32.totalorder %s285, 31
          %s287 = scalar_select %p286, %s285, 31
          %s288 = smul.addr %s287, 4
          %s289 = scalar_lea.vmem %s1, %s288
          %s290 = smul.u32 16, %s18
        $region69: #{centrality_gnn_forward.5} parent=23 // pred_fallthru
          _
      $region24: #{centrality_gnn_forward.5} parent=5 // pred_fallthru
        _
      %p291 = scmp.le.s32.totalorder 1, %s10
      %p292 = scmp.lt.s32.totalorder %s10, 5
      %p293 = pnand %p291, %p292
      %p294 = pneg %p293
      // Predicated region
      $region70: #{centrality_gnn_forward.5} parent=5 // pred_check
        _
      $region71: #{centrality_gnn_forward.5} parent=5 // pred_check_branch
        %296 = sbr.rel (%p293) target = $region73
      $region72: #{centrality_gnn_forward.5} parent=5 // pred_region
        %s297 = ssub.s32 %s10, 1
        %s298 = sand.u32 %s37, 1
        %s299 = sand.u32 %s37, 1
        %s300 = smul.addr %s299, 64
        %s301 = scalar_lea.vmem [#allocation3], %s300
        // Predicated region
        $region74: #{centrality_gnn_forward.5} parent=72 // pred_check
          %p302 = pneg %p50
        $region75: #{centrality_gnn_forward.5} parent=72 // pred_check_branch
          %304 = sbr.rel (%p302) target = $region77
        $region76: #{centrality_gnn_forward.5} parent=72 // pred_region
          _
        $region77: #{centrality_gnn_forward.5} parent=72 // pred_fallthru
          _
        %s305 = sand.u32 %s37, 1
        %s306 = sand.u32 %s37, 1
        %s307 = smul.addr %s306, 64
        %s308 = scalar_lea.vmem [#allocation3], %s307
        %p309 = pneg %p50
        %p310 = pneg %p47
        %s311 = smul.u32 16, %s20
        %p312 = scmp.lt.s32.totalorder %s311, 31
        %s313 = scalar_select %p312, %s311, 31
        %s314 = smul.addr %s313, 4
        %s315 = scalar_lea.vmem %s1, %s314
        %p316 = pneg %p76
        %p317 = pneg %p73
        %p318 = pneg %p97
        %p319 = pneg %p94
        %p320 = pneg %p118
        %p321 = pneg %p115
        %p322 = pneg %p144
        %p323 = pneg %p141
        %s324 = smul.u32 16, %s19
        %p325 = scmp.lt.s32.totalorder %s324, 31
        %s326 = scalar_select %p325, %s324, 31
        %s327 = smul.addr %s326, 8
        %s328 = scalar_lea.vmem %s4, %s327
        %s329 = smul.u32 16, %s19
        %s330 = smul.u32 16, %s20
        %p331 = scmp.lt.s32.totalorder %s330, 31
        %s332 = scalar_select %p331, %s330, 31
        %s333 = smul.addr %s332, 4
        %s334 = scalar_lea.vmem %s1, %s333
        %s335 = smul.u32 16, %s20
        %s336 = smul.u32 16, %s19
        %p337 = scmp.lt.s32.totalorder %s336, 31
        %s338 = scalar_select %p337, %s336, 31
        %s339 = smul.addr %s338, 8
        %s340 = scalar_lea.vmem %s4, %s339
        %s341 = smul.u32 16, %s19
        %p343 = scmp.eq.s32.totalorder %s20, 0
        // Predicated region
        $region78: #{centrality_gnn_forward.5} parent=72 // pred_check
          %p344 = pneg %p343
        $region79: #{centrality_gnn_forward.5} parent=72 // pred_check_branch
          %346 = sbr.rel (%p344) target = $region81
        $region80: #{centrality_gnn_forward.5} parent=72 // pred_region
          %347 = vst [vmem:[#allocation2] sm:$0xff] 0.0
          %348 = vst [vmem:[#allocation2 + $0x8] sm:$0xff] 0.0
          %349 = vst [vmem:[#allocation2 + $0x10] sm:$0xff] 0.0
          %350 = vst [vmem:[#allocation2 + $0x18] sm:$0xff] 0.0
          %351 = vst [vmem:[#allocation2 + $0x20] sm:$0xff] 0.0
          %352 = vst [vmem:[#allocation2 + $0x28] sm:$0xff] 0.0
          %353 = vst [vmem:[#allocation2 + $0x30] sm:$0xff] 0.0
          %354 = vst [vmem:[#allocation2 + $0x38] sm:$0xff] 0.0
          %355 = vst [vmem:[#allocation2 + $0x40] sm:$0xff] 0.0
          %356 = vst [vmem:[#allocation2 + $0x48] sm:$0xff] 0.0
          %357 = vst [vmem:[#allocation2 + $0x50] sm:$0xff] 0.0
          %358 = vst [vmem:[#allocation2 + $0x58] sm:$0xff] 0.0
          %359 = vst [vmem:[#allocation2 + $0x60] sm:$0xff] 0.0
          %360 = vst [vmem:[#allocation2 + $0x68] sm:$0xff] 0.0
          %361 = vst [vmem:[#allocation2 + $0x70] sm:$0xff] 0.0
          %362 = vst [vmem:[#allocation2 + $0x78] sm:$0xff] 0.0
        $region81: #{centrality_gnn_forward.5} parent=72 // pred_fallthru
          _
        %v363 = vld [vmem:[%s334] sm:$0xf]
        %v364 = vld [vmem:[%s334 + $0x4] sm:$0xf]
        %v365 = vld [vmem:[%s334 + $0x8] sm:$0xf]
        %v366 = vld [vmem:[%s334 + $0xc] sm:$0xf]
        %v367 = vld [vmem:[%s334 + $0x10] sm:$0xf]
        %v368 = vld [vmem:[%s334 + $0x14] sm:$0xf]
        %v369 = vld [vmem:[%s334 + $0x18] sm:$0xf]
        %v370 = vld [vmem:[%s334 + $0x1c] sm:$0xf]
        %v371 = vld [vmem:[%s334 + $0x20] sm:$0xf]
        %v372 = vld [vmem:[%s334 + $0x24] sm:$0xf]
        %v373 = vld [vmem:[%s334 + $0x28] sm:$0xf]
        %v374 = vld [vmem:[%s334 + $0x2c] sm:$0xf]
        %v375 = vld [vmem:[%s334 + $0x30] sm:$0xf]
        %v376 = vld [vmem:[%s334 + $0x34] sm:$0xf]
        %v377 = vld [vmem:[%s334 + $0x38] sm:$0xf]
        %v378 = vld [vmem:[%s334 + $0x3c] sm:$0xf]
        %v379 = vld [vmem:[%s2] sm:$0xf]
        %v380 = vld [vmem:[%s2 + $0x4] sm:$0xf]
        %v381 = vld [vmem:[%s2 + $0x8] sm:$0xf]
        %v382 = vld [vmem:[%s2 + $0xc] sm:$0xf]
        %v399 = vunpack.c.l.b16 %v363
        %v400 = vunpack.c.l.b16 %v364
        %v401 = vunpack.c.l.b16 %v365
        %v402 = vunpack.c.l.b16 %v366
        %v403 = vunpack.c.l.b16 %v367
        %v404 = vunpack.c.l.b16 %v368
        %v405 = vunpack.c.l.b16 %v369
        %v406 = vunpack.c.l.b16 %v370
        %v407 = vunpack.c.l.b16 %v371
        %v408 = vunpack.c.l.b16 %v372
        %v409 = vunpack.c.l.b16 %v373
        %v410 = vunpack.c.l.b16 %v374
        %v411 = vunpack.c.l.b16 %v375
        %v412 = vunpack.c.l.b16 %v376
        %v413 = vunpack.c.l.b16 %v377
        %v414 = vunpack.c.l.b16 %v378
        %v415 = vpack.c.b16 %v400, %v399
        %v416 = vpack.c.b16 %v402, %v401
        %v417 = vpack.c.b16 %v404, %v403
        %v418 = vpack.c.b16 %v406, %v405
        %v419 = vpack.c.b16 %v408, %v407
        %v420 = vpack.c.b16 %v410, %v409
        %v421 = vpack.c.b16 %v412, %v411
        %v422 = vpack.c.b16 %v414, %v413
        %v427 = vunpack.c.l.b16 %v379
        %v428 = vunpack.c.l.b16 %v380
        %v429 = vunpack.c.l.b16 %v381
        %v430 = vunpack.c.l.b16 %v382
        %v431 = vpack.c.b16 %v428, %v427
        %v432 = vpack.c.b16 %v430, %v429
        %vm435 = vcmask 261120
        %v437 = vsel %vm435, %v415, 0
        %v440 = vsel %vm435, %v416, 0
        %v443 = vsel %vm435, %v417, 0
        %v446 = vsel %vm435, %v418, 0
        %v449 = vsel %vm435, %v419, 0
        %v452 = vsel %vm435, %v420, 0
        %v455 = vsel %vm435, %v421, 0
        %v458 = vsel %vm435, %v422, 0
        %460 = vmatprep.subr.bf16.mxu0 0
        %461 = vmatpush1.bf16.msra.mxu0 0
        %462 = vmatprep.subr.bf16.mxu0 0
        %463 = vmatpush1.bf16.msra.mxu0 0
        %464 = vmatprep.subr.bf16.mxu0 0
        %465 = vmatpush1.bf16.msra.mxu0 0
        %466 = vmatprep.subr.bf16.mxu0 0
        %467 = vmatpush1.bf16.msra.mxu0 0
        %468 = vmatprep.subr.bf16.mxu0 0
        %469 = vmatpush1.bf16.msra.mxu0 0
        %470 = vmatprep.subr.bf16.mxu0 0
        %471 = vmatpush1.bf16.msra.mxu0 0
        %472 = vmatprep.subr.bf16.mxu0 0
        %473 = vmatpush1.bf16.msra.mxu0 %v432
        %474 = vmatprep.subr.bf16.mxu0 0
        %475 = vmatpush1.bf16.msra.mxu0 %v431
        %476 = vmatprep.subr.bf16.mxu0 0
        %477 = vmatpush2.bf16.msra.mxu0 0
        %478 = vmatprep.subr.bf16.mxu0 0
        %479 = vmatpush2.bf16.msra.mxu0 0
        %480 = vmatprep.subr.bf16.mxu0 0
        %481 = vmatpush2.bf16.msra.mxu0 0
        %482 = vmatprep.subr.bf16.mxu0 0
        %483 = vmatpush2.bf16.msra.mxu0 0
        %484 = vmatprep.subr.bf16.mxu0 0
        %485 = vmatpush2.bf16.msra.mxu0 0
        %486 = vmatprep.subr.bf16.mxu0 0
        %487 = vmatpush2.bf16.msra.mxu0 0
        %488 = vmatprep.subr.bf16.mxu0 0
        %489 = vmatpush2.bf16.msra.mxu0 0
        %490 = vmatprep.subr.bf16.mxu0 0
        %491 = vmatpush2.bf16.msra.mxu0 0
        %492 = vmatprep.mubr.bf16.mxu0 0
        %493 = vmatmul.mubr.bf16.gmra.mxu0 %v437
        %v494 = vpop.f32.mrf.mxu0
        %v495 = vadd.f32 0.0, %v494
        %v496 = vpop.f32.mrf.mxu0
        %v497 = vpop.f32.mrf.mxu0
        %v498 = vadd.f32 0.0, %v497
        %v499 = vpop.f32.mrf.mxu0
        %500 = vmatprep.mubr.bf16.mxu0 0
        %501 = vmatmul.mubr.bf16.gmra.mxu0 %v440
        %v502 = vpop.f32.mrf.mxu0
        %v503 = vadd.f32 0.0, %v502
        %v504 = vpop.f32.mrf.mxu0
        %v505 = vpop.f32.mrf.mxu0
        %v506 = vadd.f32 0.0, %v505
        %v507 = vpop.f32.mrf.mxu0
        %508 = vmatprep.mubr.bf16.mxu0 0
        %509 = vmatmul.mubr.bf16.gmra.mxu0 %v443
        %v510 = vpop.f32.mrf.mxu0
        %v511 = vadd.f32 0.0, %v510
        %v512 = vpop.f32.mrf.mxu0
        %v513 = vpop.f32.mrf.mxu0
        %v514 = vadd.f32 0.0, %v513
        %v515 = vpop.f32.mrf.mxu0
        %516 = vmatprep.mubr.bf16.mxu0 0
        %517 = vmatmul.mubr.bf16.gmra.mxu0 %v446
        %v518 = vpop.f32.mrf.mxu0
        %v519 = vadd.f32 0.0, %v518
        %v520 = vpop.f32.mrf.mxu0
        %v521 = vpop.f32.mrf.mxu0
        %v522 = vadd.f32 0.0, %v521
        %v523 = vpop.f32.mrf.mxu0
        %524 = vmatprep.mubr.bf16.mxu0 0
        %525 = vmatmul.mubr.bf16.gmra.mxu0 %v449
        %v526 = vpop.f32.mrf.mxu0
        %v527 = vadd.f32 0.0, %v526
        %v528 = vpop.f32.mrf.mxu0
        %v529 = vpop.f32.mrf.mxu0
        %v530 = vadd.f32 0.0, %v529
        %v531 = vpop.f32.mrf.mxu0
        %532 = vmatprep.mubr.bf16.mxu0 0
        %533 = vmatmul.mubr.bf16.gmra.mxu0 %v452
        %v534 = vpop.f32.mrf.mxu0
        %v535 = vadd.f32 0.0, %v534
        %v536 = vpop.f32.mrf.mxu0
        %v537 = vpop.f32.mrf.mxu0
        %v538 = vadd.f32 0.0, %v537
        %v539 = vpop.f32.mrf.mxu0
        %540 = vmatprep.mubr.bf16.mxu0 0
        %541 = vmatmul.mubr.bf16.gmra.mxu0 %v455
        %v542 = vpop.f32.mrf.mxu0
        %v543 = vadd.f32 0.0, %v542
        %v544 = vpop.f32.mrf.mxu0
        %v545 = vpop.f32.mrf.mxu0
        %v546 = vadd.f32 0.0, %v545
        %v547 = vpop.f32.mrf.mxu0
        %548 = vmatprep.mubr.bf16.mxu0 0
        %549 = vmatmul.mubr.bf16.gmra.mxu0 %v458
        %v550 = vpop.f32.mrf.mxu0
        %v551 = vadd.f32 0.0, %v550
        %v552 = vpop.f32.mrf.mxu0
        %v553 = vpop.f32.mrf.mxu0
        %v554 = vadd.f32 0.0, %v553
        %v555 = vpop.f32.mrf.mxu0
        %556 = vdwg.mxu0
        %v557 = vld [vmem:[#allocation2] sm:$0xff]
        %v558 = vld [vmem:[#allocation2 + $0x8] sm:$0xff]
        %v559 = vld [vmem:[#allocation2 + $0x10] sm:$0xff]
        %v560 = vld [vmem:[#allocation2 + $0x18] sm:$0xff]
        %v561 = vld [vmem:[#allocation2 + $0x20] sm:$0xff]
        %v562 = vld [vmem:[#allocation2 + $0x28] sm:$0xff]
        %v563 = vld [vmem:[#allocation2 + $0x30] sm:$0xff]
        %v564 = vld [vmem:[#allocation2 + $0x38] sm:$0xff]
        %v565 = vld [vmem:[#allocation2 + $0x40] sm:$0xff]
        %v566 = vld [vmem:[#allocation2 + $0x48] sm:$0xff]
        %v567 = vld [vmem:[#allocation2 + $0x50] sm:$0xff]
        %v568 = vld [vmem:[#allocation2 + $0x58] sm:$0xff]
        %v569 = vld [vmem:[#allocation2 + $0x60] sm:$0xff]
        %v570 = vld [vmem:[#allocation2 + $0x68] sm:$0xff]
        %v571 = vld [vmem:[#allocation2 + $0x70] sm:$0xff]
        %v572 = vld [vmem:[#allocation2 + $0x78] sm:$0xff]
        %v573 = vld [vmem:[%s301] sm:$0xf]
        %v574 = vld [vmem:[%s301 + $0x4] sm:$0xf]
        %v575 = vld [vmem:[%s301 + $0x8] sm:$0xf]
        %v576 = vld [vmem:[%s301 + $0xc] sm:$0xf]
        %v577 = vld [vmem:[%s301 + $0x10] sm:$0xf]
        %v578 = vld [vmem:[%s301 + $0x14] sm:$0xf]
        %v579 = vld [vmem:[%s301 + $0x18] sm:$0xf]
        %v580 = vld [vmem:[%s301 + $0x1c] sm:$0xf]
        %v581 = vld [vmem:[%s301 + $0x20] sm:$0xf]
        %v582 = vld [vmem:[%s301 + $0x24] sm:$0xf]
        %v583 = vld [vmem:[%s301 + $0x28] sm:$0xf]
        %v584 = vld [vmem:[%s301 + $0x2c] sm:$0xf]
        %v585 = vld [vmem:[%s301 + $0x30] sm:$0xf]
        %v586 = vld [vmem:[%s301 + $0x34] sm:$0xf]
        %v587 = vld [vmem:[%s301 + $0x38] sm:$0xf]
        %v588 = vld [vmem:[%s301 + $0x3c] sm:$0xf]
        %v589 = vpack.c.bf16 %v498, %v495
        %v590 = vpack.c.bf16 %v506, %v503
        %v591 = vpack.c.bf16 %v514, %v511
        %v592 = vpack.c.bf16 %v522, %v519
        %v593 = vpack.c.bf16 %v530, %v527
        %v594 = vpack.c.bf16 %v538, %v535
        %v595 = vpack.c.bf16 %v546, %v543
        %v596 = vpack.c.bf16 %v554, %v551
        %v613 = vunpack.c.l.b16 %v573
        %v614 = vunpack.c.l.b16 %v574
        %v615 = vunpack.c.l.b16 %v575
        %v616 = vunpack.c.l.b16 %v576
        %v617 = vunpack.c.l.b16 %v577
        %v618 = vunpack.c.l.b16 %v578
        %v619 = vunpack.c.l.b16 %v579
        %v620 = vunpack.c.l.b16 %v580
        %v621 = vunpack.c.l.b16 %v581
        %v622 = vunpack.c.l.b16 %v582
        %v623 = vunpack.c.l.b16 %v583
        %v624 = vunpack.c.l.b16 %v584
        %v625 = vunpack.c.l.b16 %v585
        %v626 = vunpack.c.l.b16 %v586
        %v627 = vunpack.c.l.b16 %v587
        %v628 = vunpack.c.l.b16 %v588
        %v629 = vpack.c.b16 %v614, %v613
        %v630 = vpack.c.b16 %v616, %v615
        %v631 = vpack.c.b16 %v618, %v617
        %v632 = vpack.c.b16 %v620, %v619
        %v633 = vpack.c.b16 %v622, %v621
        %v634 = vpack.c.b16 %v624, %v623
        %v635 = vpack.c.b16 %v626, %v625
        %v636 = vpack.c.b16 %v628, %v627
        %645 = vmatprep.subr.bf16.mxu0 0
        %646 = vmatpush1.bf16.msra.mxu0 %v596
        %647 = vmatprep.subr.bf16.mxu0 0
        %648 = vmatpush1.bf16.msra.mxu0 %v595
        %649 = vmatprep.subr.bf16.mxu0 0
        %650 = vmatpush1.bf16.msra.mxu0 %v594
        %651 = vmatprep.subr.bf16.mxu0 0
        %652 = vmatpush1.bf16.msra.mxu0 %v593
        %653 = vmatprep.subr.bf16.mxu0 0
        %654 = vmatpush1.bf16.msra.mxu0 %v592
        %655 = vmatprep.subr.bf16.mxu0 0
        %656 = vmatpush1.bf16.msra.mxu0 %v591
        %657 = vmatprep.subr.bf16.mxu0 0
        %658 = vmatpush1.bf16.msra.mxu0 %v590
        %659 = vmatprep.subr.bf16.mxu0 0
        %660 = vmatpush1.bf16.msra.mxu0 %v589
        %661 = vmatprep.subr.bf16.mxu0 0
        %662 = vmatpush2.bf16.msra.mxu0 0
        %663 = vmatprep.subr.bf16.mxu0 0
        %664 = vmatpush2.bf16.msra.mxu0 0
        %665 = vmatprep.subr.bf16.mxu0 0
        %666 = vmatpush2.bf16.msra.mxu0 0
        %667 = vmatprep.subr.bf16.mxu0 0
        %668 = vmatpush2.bf16.msra.mxu0 0
        %669 = vmatprep.subr.bf16.mxu0 0
        %670 = vmatpush2.bf16.msra.mxu0 0
        %671 = vmatprep.subr.bf16.mxu0 0
        %672 = vmatpush2.bf16.msra.mxu0 0
        %673 = vmatprep.subr.bf16.mxu0 0
        %674 = vmatpush2.bf16.msra.mxu0 0
        %675 = vmatprep.subr.bf16.mxu0 0
        %676 = vmatpush2.bf16.msra.mxu0 0
        %677 = vmatprep.mubr.bf16.mxu0 0
        %678 = vmatmul.mubr.bf16.gmra.mxu0 %v629
        %v679 = vpop.f32.mrf.mxu0
        %v680 = vadd.f32 0.0, %v679
        %v681 = vpop.f32.mrf.mxu0
        %v682 = vpop.f32.mrf.mxu0
        %v683 = vadd.f32 0.0, %v682
        %v684 = vpop.f32.mrf.mxu0
        %685 = vmatprep.mubr.bf16.mxu0 0
        %686 = vmatmul.mubr.bf16.gmra.mxu0 %v630
        %v687 = vpop.f32.mrf.mxu0
        %v688 = vadd.f32 0.0, %v687
        %v689 = vpop.f32.mrf.mxu0
        %v690 = vpop.f32.mrf.mxu0
        %v691 = vadd.f32 0.0, %v690
        %v692 = vpop.f32.mrf.mxu0
        %693 = vmatprep.mubr.bf16.mxu0 0
        %694 = vmatmul.mubr.bf16.gmra.mxu0 %v631
        %v695 = vpop.f32.mrf.mxu0
        %v696 = vadd.f32 0.0, %v695
        %v697 = vpop.f32.mrf.mxu0
        %v698 = vpop.f32.mrf.mxu0
        %v699 = vadd.f32 0.0, %v698
        %v700 = vpop.f32.mrf.mxu0
        %701 = vmatprep.mubr.bf16.mxu0 0
        %702 = vmatmul.mubr.bf16.gmra.mxu0 %v632
        %v703 = vpop.f32.mrf.mxu0
        %v704 = vadd.f32 0.0, %v703
        %v705 = vpop.f32.mrf.mxu0
        %v706 = vpop.f32.mrf.mxu0
        %v707 = vadd.f32 0.0, %v706
        %v708 = vpop.f32.mrf.mxu0
        %709 = vmatprep.mubr.bf16.mxu0 0
        %710 = vmatmul.mubr.bf16.gmra.mxu0 %v633
        %v711 = vpop.f32.mrf.mxu0
        %v712 = vadd.f32 0.0, %v711
        %v713 = vpop.f32.mrf.mxu0
        %v714 = vpop.f32.mrf.mxu0
        %v715 = vadd.f32 0.0, %v714
        %v716 = vpop.f32.mrf.mxu0
        %717 = vmatprep.mubr.bf16.mxu0 0
        %718 = vmatmul.mubr.bf16.gmra.mxu0 %v634
        %v719 = vpop.f32.mrf.mxu0
        %v720 = vadd.f32 0.0, %v719
        %v721 = vpop.f32.mrf.mxu0
        %v722 = vpop.f32.mrf.mxu0
        %v723 = vadd.f32 0.0, %v722
        %v724 = vpop.f32.mrf.mxu0
        %725 = vmatprep.mubr.bf16.mxu0 0
        %726 = vmatmul.mubr.bf16.gmra.mxu0 %v635
        %v727 = vpop.f32.mrf.mxu0
        %v728 = vadd.f32 0.0, %v727
        %v729 = vpop.f32.mrf.mxu0
        %v730 = vpop.f32.mrf.mxu0
        %v731 = vadd.f32 0.0, %v730
        %v732 = vpop.f32.mrf.mxu0
        %733 = vmatprep.mubr.bf16.mxu0 0
        %734 = vmatmul.mubr.bf16.gmra.mxu0 %v636
        %v735 = vpop.f32.mrf.mxu0
        %v736 = vadd.f32 0.0, %v735
        %v737 = vpop.f32.mrf.mxu0
        %v738 = vpop.f32.mrf.mxu0
        %v739 = vadd.f32 0.0, %v738
        %v740 = vpop.f32.mrf.mxu0
        %741 = vdwg.mxu0
        %v742 = vadd.f32 %v557, %v680
        %v743 = vadd.f32 %v558, %v683
        %v744 = vadd.f32 %v559, %v688
        %v745 = vadd.f32 %v560, %v691
        %v746 = vadd.f32 %v561, %v696
        %v747 = vadd.f32 %v562, %v699
        %v748 = vadd.f32 %v563, %v704
        %v749 = vadd.f32 %v564, %v707
        %v750 = vadd.f32 %v565, %v712
        %v751 = vadd.f32 %v566, %v715
        %v752 = vadd.f32 %v567, %v720
        %v753 = vadd.f32 %v568, %v723
        %v754 = vadd.f32 %v569, %v728
        %v755 = vadd.f32 %v570, %v731
        %v756 = vadd.f32 %v571, %v736
        %v757 = vadd.f32 %v572, %v739
        %758 = vst [vmem:[#allocation2] sm:$0xff] %v742
        %759 = vst [vmem:[#allocation2 + $0x8] sm:$0xff] %v743
        %760 = vst [vmem:[#allocation2 + $0x10] sm:$0xff] %v744
        %761 = vst [vmem:[#allocation2 + $0x18] sm:$0xff] %v745
        %762 = vst [vmem:[#allocation2 + $0x20] sm:$0xff] %v746
        %763 = vst [vmem:[#allocation2 + $0x28] sm:$0xff] %v747
        %764 = vst [vmem:[#allocation2 + $0x30] sm:$0xff] %v748
        %765 = vst [vmem:[#allocation2 + $0x38] sm:$0xff] %v749
        %766 = vst [vmem:[#allocation2 + $0x40] sm:$0xff] %v750
        %767 = vst [vmem:[#allocation2 + $0x48] sm:$0xff] %v751
        %768 = vst [vmem:[#allocation2 + $0x50] sm:$0xff] %v752
        %769 = vst [vmem:[#allocation2 + $0x58] sm:$0xff] %v753
        %770 = vst [vmem:[#allocation2 + $0x60] sm:$0xff] %v754
        %771 = vst [vmem:[#allocation2 + $0x68] sm:$0xff] %v755
        %772 = vst [vmem:[#allocation2 + $0x70] sm:$0xff] %v756
        %773 = vst [vmem:[#allocation2 + $0x78] sm:$0xff] %v757
        %p774 = scmp.eq.s32.totalorder %s20, 1
        // Predicated region
        $region82: #{centrality_gnn_forward.5} parent=72 // pred_check
          %p775 = pneg %p774
        $region83: #{centrality_gnn_forward.5} parent=72 // pred_check_branch
          %777 = sbr.rel (%p775) target = $region85
        $region84: #{centrality_gnn_forward.5} parent=72 // pred_region
          %v778 = vld [vmem:[#allocation2] sm:$0xff]
          %v779 = vld [vmem:[#allocation2 + $0x8] sm:$0xff]
          %v780 = vld [vmem:[#allocation2 + $0x10] sm:$0xff]
          %v781 = vld [vmem:[#allocation2 + $0x18] sm:$0xff]
          %v782 = vld [vmem:[#allocation2 + $0x20] sm:$0xff]
          %v783 = vld [vmem:[#allocation2 + $0x28] sm:$0xff]
          %v784 = vld [vmem:[#allocation2 + $0x30] sm:$0xff]
          %v785 = vld [vmem:[#allocation2 + $0x38] sm:$0xff]
          %v786 = vld [vmem:[#allocation2 + $0x40] sm:$0xff]
          %v787 = vld [vmem:[#allocation2 + $0x48] sm:$0xff]
          %v788 = vld [vmem:[#allocation2 + $0x50] sm:$0xff]
          %v789 = vld [vmem:[#allocation2 + $0x58] sm:$0xff]
          %v790 = vld [vmem:[#allocation2 + $0x60] sm:$0xff]
          %v791 = vld [vmem:[#allocation2 + $0x68] sm:$0xff]
          %v792 = vld [vmem:[#allocation2 + $0x70] sm:$0xff]
          %v793 = vld [vmem:[#allocation2 + $0x78] sm:$0xff]
          %v794 = vld [vmem:[%s3] sm:$0x1]
          %v796 = vlaneseq
          %v797 = vshrl.u32 %v796, 7
          %v798 = vsub.s32 0, %v797
          %v799 = vrot.slane %v794, %v798
          %v801 = vadd.f32 %v778, %v799
          %v802 = vadd.f32 %v779, %v799
          %v803 = vadd.f32 %v780, %v799
          %v804 = vadd.f32 %v781, %v799
          %v805 = vadd.f32 %v782, %v799
          %v806 = vadd.f32 %v783, %v799
          %v807 = vadd.f32 %v784, %v799
          %v808 = vadd.f32 %v785, %v799
          %v809 = vadd.f32 %v786, %v799
          %v810 = vadd.f32 %v787, %v799
          %v811 = vadd.f32 %v788, %v799
          %v812 = vadd.f32 %v789, %v799
          %v813 = vadd.f32 %v790, %v799
          %v814 = vadd.f32 %v791, %v799
          %v815 = vadd.f32 %v792, %v799
          %v816 = vadd.f32 %v793, %v799
          %817 = vst [vmem:[%s340] sm:$0xff] %v801
          %818 = vst [vmem:[%s340 + $0x8] sm:$0xff] %v802
          %819 = vst [vmem:[%s340 + $0x10] sm:$0xff] %v803
          %820 = vst [vmem:[%s340 + $0x18] sm:$0xff] %v804
          %821 = vst [vmem:[%s340 + $0x20] sm:$0xff] %v805
          %822 = vst [vmem:[%s340 + $0x28] sm:$0xff] %v806
          %823 = vst [vmem:[%s340 + $0x30] sm:$0xff] %v807
          %824 = vst [vmem:[%s340 + $0x38] sm:$0xff] %v808
          %825 = vst [vmem:[%s340 + $0x40] sm:$0xff] %v809
          %826 = vst [vmem:[%s340 + $0x48] sm:$0xff] %v810
          %827 = vst [vmem:[%s340 + $0x50] sm:$0xff] %v811
          %828 = vst [vmem:[%s340 + $0x58] sm:$0xff] %v812
          %829 = vst [vmem:[%s340 + $0x60] sm:$0xff] %v813
          %830 = vst [vmem:[%s340 + $0x68] sm:$0xff] %v814
          %831 = vst [vmem:[%s340 + $0x70] sm:$0xff] %v815
          %832 = vst [vmem:[%s340 + $0x78] sm:$0xff] %v816
        $region85: #{centrality_gnn_forward.5} parent=72 // pred_fallthru
          _
        %s833 = smul.u32 16, %s19
        %p834 = scmp.lt.s32.totalorder %s833, 31
        %s835 = scalar_select %p834, %s833, 31
        %s836 = smul.addr %s835, 8
        %s837 = scalar_lea.vmem %s4, %s836
        // Predicated region
        $region86: #{centrality_gnn_forward.5} parent=72 // pred_check
          %p838 = pneg %p141
        $region87: #{centrality_gnn_forward.5} parent=72 // pred_check_branch
          %840 = sbr.rel (%p838) target = $region89
        $region88: #{centrality_gnn_forward.5} parent=72 // pred_region
          %s841 = smul.u32 16, %s19
        $region89: #{centrality_gnn_forward.5} parent=72 // pred_fallthru
          _
      $region73: #{centrality_gnn_forward.5} parent=5 // pred_fallthru
        _
      %p842 = scmp.le.s32.totalorder 2, %s10
      // Predicated region
      $region90: #{centrality_gnn_forward.5} parent=5 // pred_check
        %p843 = pneg %p842
      $region91: #{centrality_gnn_forward.5} parent=5 // pred_check_branch
        %845 = sbr.rel (%p843) target = $region93
      $region92: #{centrality_gnn_forward.5} parent=5 // pred_region
        %s846 = ssub.s32 %s10, 2
        // Predicated region
        $region94: #{centrality_gnn_forward.5} parent=92 // pred_check
          %p847 = pneg %p147
        $region95: #{centrality_gnn_forward.5} parent=92 // pred_check_branch
          %849 = sbr.rel (%p847) target = $region97
        $region96: #{centrality_gnn_forward.5} parent=92 // pred_region
          %s850 = smul.u32 16, %s21
          %p851 = scmp.lt.s32.totalorder %s850, 31
          %s852 = scalar_select %p851, %s850, 31
          %s853 = smul.addr %s852, 8
          %s854 = scalar_lea.vmem %s4, %s853
        $region97: #{centrality_gnn_forward.5} parent=92 // pred_fallthru
          _
      $region93: #{centrality_gnn_forward.5} parent=5 // pred_fallthru
        _
    $region6: #{centrality_gnn_forward.5} parent=1 // loop_footer
      %s14 = sadd.s32 1, %s10
    $region7: #{centrality_gnn_forward.5} parent=1 // loop_footer_branch
      %9 = sbr.rel target = $region3
    $region8: #{centrality_gnn_forward.5} parent=1 // loop_exit
      _

// kernel: centrality_gnn_forward.3
$region0: #{centrality_gnn_forward.3}
  #allocation0 [shape = 'u32[]', space=smem, size = 0x4, offset = 0x4, fixed_abs, tag = 'smem constant byte address 0x4 - core index']
  #allocation1 [shape = 'u32[144,128]{1,0:T(1,128)}', space=vmem, size = 0x12000, scoped, tag = 'internal scratch']
  #allocation2 [shape = 'f32[128,32]{1,0:T(8,128)}', space=vmem, size = 0x10000, scoped, tag = 'scratch operand']
  %s0 = inlined_call_operand.hbm [shape: bf16[256,256], index: 0, kind: input, shape index: {}]
  %s1 = inlined_call_operand.vmem [shape: bf16[256,8], index: 1, kind: input, shape index: {}]
  %s2 = inlined_call_operand.vmem [shape: bf16[8,32], index: 2, kind: input, shape index: {}]
  %s3 = inlined_call_operand.vmem [shape: f32[1,32], index: 3, kind: input, shape index: {}]
  %s4 = inlined_call_operand.vmem [shape: bf16[256,32], index: 4, kind: output, shape index: {}]
  %s5 = sld [smem:[#allocation0]]
  $region61: #{centrality_gnn_forward.3} parent=0
    _
  %s7 = ssub.s32 1, %s5
  %s8 = scalar_select 0, %s7, %s5
  $region1: #{centrality_gnn_forward.3} parent=0
    #allocation3 [shape = 'u8[65536]{0}', space=vmem, size = 0x10000, scoped, tag = 'input window, operand 0']
    #allocation4 [shape = 's32[2]{0}', space=sflag, size = 0x8, scoped, tag = 'scoped memory for centrality_gnn_forward.3']
    %9 = vsyncpa [#allocation4], 0
    %s10 = scalar_lea.sflag [#allocation4], 1
    %11 = vsyncpa %s10, 0
    loop: start=0, step=1, limit=6
    $region2: #{centrality_gnn_forward.3} parent=1 // loop_pre_header
      _
    $region3: #{centrality_gnn_forward.3} parent=1 // loop_header
      %s13 = sphi 0, %s17
      %p14 = scmp.ge.s32.totalorder %s13, 6
      %s20 = sphi 0, %s32
      %s21 = sphi 0, %s28
      %s22 = sphi 0, %s20
      %s23 = sphi 0, %s21
      %s24 = sphi 0, %s22
      %s25 = sphi 0, %s23
      %s37 = sphi 0, %s39
      %s40 = sphi 0, %s37
      %s41 = sphi 0, %s40
      %s57 = sphi 0, %s41
      %s63 = sphi 0, %s65
      %s66 = sphi 0, %s63
      %s67 = sphi 0, %s66
      %s83 = sphi 0, %s67
      %s87 = sphi 0, %s87
      %s89 = sphi 0, %s87
      %s90 = sphi 0, %s89
      %s104 = sphi 0, %s90
      %s108 = sphi 0, %s108
      %s110 = sphi 0, %s108
      %s111 = sphi 0, %s110
      %s125 = sphi 0, %s111
      %s131 = sphi 0, %s133
      %s134 = sphi 0, %s131
      %s135 = sphi 0, %s134
      %s151 = sphi 0, %s135
    $region4: #{centrality_gnn_forward.3} parent=1 // loop_header_branch
      %16 = sbr.rel (%p14) target = $region8
    $region5: #{centrality_gnn_forward.3} parent=1 // loop_body
      %s18 = ssub.s32 %s13, 1
      %s19 = ssub.s32 %s13, 2
      %s26 = sadd.s32 1, %s21
      %p27 = scmp.ge.s32.totalorder %s26, 2
      %s28 = scalar_select %p27, 0, %s26
      %s29 = sadd.s32 1, %s20
      %s30 = scalar_select %p27, %s29, %s20
      %p31 = scmp.ge.s32.totalorder %s30, 2
      %s32 = scalar_select %p31, 0, %s30
      %s33 = ssub.s32 %s20, %s32
      %s34 = ssub.s32 %s21, %s28
      %s35 = sor.u32 %s33, %s34
      %p36 = scmp.eq.s32.totalorder %s35, 0
      %s38 = sadd.s32 %s37, 1
      %s39 = scalar_select %p36, %s37, %s38
      %p42 = pneg %p36
      %p43 = scmp.eq.s32.totalorder %s13, 3
      %p44 = por %p42, %p43
      %p45 = scmp.ne.s32.totalorder %s37, %s40
      %p46 = scmp.eq.s32.totalorder %s13, 0
      %p47 = por %p45, %p46
      %p48 = scmp.ne.s32.totalorder %s37, %s40
      %p49 = scmp.eq.s32.totalorder %s18, 3
      %p50 = por %p48, %p49
      %p51 = scmp.ne.s32.totalorder %s40, %s41
      %p52 = scmp.eq.s32.totalorder %s18, 0
      %p53 = por %p51, %p52
      %p54 = scmp.ne.s32.totalorder %s40, %s41
      %p55 = scmp.eq.s32.totalorder %s19, 3
      %p56 = por %p54, %p55
      %p58 = scmp.ne.s32.totalorder %s41, %s57
      %p59 = scmp.eq.s32.totalorder %s19, 0
      %p60 = por %p58, %p59
      %s61 = ssub.s32 %s21, %s28
      %p62 = scmp.eq.s32.totalorder %s61, 0
      %s64 = sadd.s32 %s63, 1
      %s65 = scalar_select %p62, %s63, %s64
      %p68 = pneg %p62
      %p69 = scmp.eq.s32.totalorder %s13, 3
      %p70 = por %p68, %p69
      %p71 = scmp.ne.s32.totalorder %s63, %s66
      %p72 = scmp.eq.s32.totalorder %s13, 0
      %p73 = por %p71, %p72
      %p74 = scmp.ne.s32.totalorder %s63, %s66
      %p75 = scmp.eq.s32.totalorder %s18, 3
      %p76 = por %p74, %p75
      %p77 = scmp.ne.s32.totalorder %s66, %s67
      %p78 = scmp.eq.s32.totalorder %s18, 0
      %p79 = por %p77, %p78
      %p80 = scmp.ne.s32.totalorder %s66, %s67
      %p81 = scmp.eq.s32.totalorder %s19, 3
      %p82 = por %p80, %p81
      %p84 = scmp.ne.s32.totalorder %s67, %s83
      %p85 = scmp.eq.s32.totalorder %s19, 0
      %p86 = por %p84, %p85
      %s88 = sadd.s32 %s87, 1
      %p91 = scmp.eq.s32.totalorder %s13, 3
      %p92 = scmp.ne.s32.totalorder %s87, %s89
      %p93 = scmp.eq.s32.totalorder %s13, 0
      %p94 = por %p92, %p93
      %p95 = scmp.ne.s32.totalorder %s87, %s89
      %p96 = scmp.eq.s32.totalorder %s18, 3
      %p97 = por %p95, %p96
      %p98 = scmp.ne.s32.totalorder %s89, %s90
      %p99 = scmp.eq.s32.totalorder %s18, 0
      %p100 = por %p98, %p99
      %p101 = scmp.ne.s32.totalorder %s89, %s90
      %p102 = scmp.eq.s32.totalorder %s19, 3
      %p103 = por %p101, %p102
      %p105 = scmp.ne.s32.totalorder %s90, %s104
      %p106 = scmp.eq.s32.totalorder %s19, 0
      %p107 = por %p105, %p106
      %s109 = sadd.s32 %s108, 1
      %p112 = scmp.eq.s32.totalorder %s13, 3
      %p113 = scmp.ne.s32.totalorder %s108, %s110
      %p114 = scmp.eq.s32.totalorder %s13, 0
      %p115 = por %p113, %p114
      %p116 = scmp.ne.s32.totalorder %s108, %s110
      %p117 = scmp.eq.s32.totalorder %s18, 3
      %p118 = por %p116, %p117
      %p119 = scmp.ne.s32.totalorder %s110, %s111
      %p120 = scmp.eq.s32.totalorder %s18, 0
      %p121 = por %p119, %p120
      %p122 = scmp.ne.s32.totalorder %s110, %s111
      %p123 = scmp.eq.s32.totalorder %s19, 3
      %p124 = por %p122, %p123
      %p126 = scmp.ne.s32.totalorder %s111, %s125
      %p127 = scmp.eq.s32.totalorder %s19, 0
      %p128 = por %p126, %p127
      %s129 = ssub.s32 %s20, %s32
      %p130 = scmp.eq.s32.totalorder %s129, 0
      %s132 = sadd.s32 %s131, 1
      %s133 = scalar_select %p130, %s131, %s132
      %p136 = pneg %p130
      %p137 = scmp.eq.s32.totalorder %s13, 3
      %p138 = por %p136, %p137
      %p139 = scmp.ne.s32.totalorder %s131, %s134
      %p140 = scmp.eq.s32.totalorder %s13, 0
      %p141 = por %p139, %p140
      %p142 = scmp.ne.s32.totalorder %s131, %s134
      %p143 = scmp.eq.s32.totalorder %s18, 3
      %p144 = por %p142, %p143
      %p145 = scmp.ne.s32.totalorder %s134, %s135
      %p146 = scmp.eq.s32.totalorder %s18, 0
      %p147 = por %p145, %p146
      %p148 = scmp.ne.s32.totalorder %s134, %s135
      %p149 = scmp.eq.s32.totalorder %s19, 3
      %p150 = por %p148, %p149
      %p152 = scmp.ne.s32.totalorder %s135, %s151
      %p153 = scmp.eq.s32.totalorder %s19, 0
      %p154 = por %p152, %p153
      %p155 = scmp.le.s32.totalorder 1, %s13
      %p156 = scmp.lt.s32.totalorder %s13, 5
      %p157 = pnand %p155, %p156
      %p158 = pneg %p157
      // Predicated region
      $region9: #{centrality_gnn_forward.3} parent=5 // pred_check
        _
      $region10: #{centrality_gnn_forward.3} parent=5 // pred_check_branch
        %160 = sbr.rel (%p157) target = $region12
      $region11: #{centrality_gnn_forward.3} parent=5 // pred_region
        %s161 = ssub.s32 %s13, 1
        // Predicated region
        $region13: #{centrality_gnn_forward.3} parent=11 // pred_check
          %p162 = pneg %p100
        $region14: #{centrality_gnn_forward.3} parent=11 // pred_check_branch
          %164 = sbr.rel (%p162) target = $region16
        $region15: #{centrality_gnn_forward.3} parent=11 // pred_region
          _
        $region16: #{centrality_gnn_forward.3} parent=11 // pred_fallthru
          _
        // Predicated region
        $region17: #{centrality_gnn_forward.3} parent=11 // pred_check
          %p165 = pneg %p121
        $region18: #{centrality_gnn_forward.3} parent=11 // pred_check_branch
          %167 = sbr.rel (%p165) target = $region20
        $region19: #{centrality_gnn_forward.3} parent=11 // pred_region
          _
        $region20: #{centrality_gnn_forward.3} parent=11 // pred_fallthru
          _
      $region12: #{centrality_gnn_forward.3} parent=5 // pred_fallthru
        _
      %p168 = scmp.lt.s32.totalorder %s13, 4
      // Predicated region
      $region21: #{centrality_gnn_forward.3} parent=5 // pred_check
        %p169 = pneg %p168
      $region22: #{centrality_gnn_forward.3} parent=5 // pred_check_branch
        %171 = sbr.rel (%p169) target = $region24
      $region23: #{centrality_gnn_forward.3} parent=5 // pred_region
        // Predicated region
        $region25: #{centrality_gnn_forward.3} parent=23 // pred_check
          %p172 = pneg %p47
        $region26: #{centrality_gnn_forward.3} parent=23 // pred_check_branch
          %174 = sbr.rel (%p172) target = $region28
        $region27: #{centrality_gnn_forward.3} parent=23 // pred_region
          %s175 = sand.u32 %s37, 1
          %s176 = scalar_lea.sflag [#allocation4], %s175
          %s177 = sand.u32 %s37, 1
          %s178 = smul.addr %s177, 64
          %s179 = scalar_lea.vmem [#allocation3], %s178
          %s180 = smul.u32 16, %s20
          %s182 = ssub.s32 1024, 1024
          %183 = vsyncadd %s176, %s182
          %s184 = smul.addr %s180, 2
          %s185 = sadd.s32 %s21, %s184
          %s186 = smul.addr %s185, 64
          %s187 = scalar_lea.hbm %s0, %s186
          %s188 = sshll.u32 %s179, 4
          %s189 = int_to_ptr.vmem [resolvable:$true] %s188
          %194 = dma.hbm_to_vmem [thread:$0]  %s187, 1024, %s189, %s176, 128, 64, 4
        $region28: #{centrality_gnn_forward.3} parent=23 // pred_fallthru
          _
        // Predicated region
        $region29: #{centrality_gnn_forward.3} parent=23 // pred_check
          %p195 = pneg %p73
        $region30: #{centrality_gnn_forward.3} parent=23 // pred_check_branch
          %197 = sbr.rel (%p195) target = $region32
        $region31: #{centrality_gnn_forward.3} parent=23 // pred_region
          %s198 = smul.u32 16, %s21
          %p199 = scmp.lt.s32.totalorder %s198, 31
          %s200 = scalar_select %p199, %s198, 31
          %s201 = smul.addr %s200, 4
          %s202 = scalar_lea.vmem %s1, %s201
          %s203 = smul.u32 16, %s21
        $region32: #{centrality_gnn_forward.3} parent=23 // pred_fallthru
          _
      $region24: #{centrality_gnn_forward.3} parent=5 // pred_fallthru
        _
      %p204 = scmp.le.s32.totalorder 1, %s13
      %p205 = scmp.lt.s32.totalorder %s13, 5
      %p206 = pnand %p204, %p205
      %p207 = pneg %p206
      // Predicated region
      $region33: #{centrality_gnn_forward.3} parent=5 // pred_check
        _
      $region34: #{centrality_gnn_forward.3} parent=5 // pred_check_branch
        %209 = sbr.rel (%p206) target = $region36
      $region35: #{centrality_gnn_forward.3} parent=5 // pred_region
        %s210 = ssub.s32 %s13, 1
        %s211 = sand.u32 %s40, 1
        %s212 = scalar_lea.sflag [#allocation4], %s211
        %s213 = sand.u32 %s40, 1
        %s214 = smul.addr %s213, 64
        %s215 = scalar_lea.vmem [#allocation3], %s214
        // Predicated region
        $region37: #{centrality_gnn_forward.3} parent=35 // pred_check
          %p216 = pneg %p53
        $region38: #{centrality_gnn_forward.3} parent=35 // pred_check_branch
          %218 = sbr.rel (%p216) target = $region40
        $region39: #{centrality_gnn_forward.3} parent=35 // pred_region
          %219 = dma.done %s212, 1024
        $region40: #{centrality_gnn_forward.3} parent=35 // pred_fallthru
          _
        %s220 = sand.u32 %s40, 1
        %s221 = scalar_lea.sflag [#allocation4], %s220
        %s222 = sand.u32 %s40, 1
        %s223 = smul.addr %s222, 64
        %s224 = scalar_lea.vmem [#allocation3], %s223
        %p225 = pneg %p53
        %p226 = pneg %p50
        %s227 = smul.u32 16, %s23
        %p228 = scmp.lt.s32.totalorder %s227, 31
        %s229 = scalar_select %p228, %s227, 31
        %s230 = smul.addr %s229, 4
        %s231 = scalar_lea.vmem %s1, %s230
        %p232 = pneg %p79
        %p233 = pneg %p76
        %p234 = pneg %p100
        %p235 = pneg %p97
        %p236 = pneg %p121
        %p237 = pneg %p118
        %p238 = pneg %p147
        %p239 = pneg %p144
        %s240 = smul.u32 16, %s22
        %p241 = scmp.lt.s32.totalorder %s240, 31
        %s242 = scalar_select %p241, %s240, 31
        %s243 = smul.addr %s242, 4
        %s244 = scalar_lea.vmem %s4, %s243
        %s245 = smul.u32 16, %s22
        %s246 = smul.u32 16, %s23
        %p247 = scmp.lt.s32.totalorder %s246, 31
        %s248 = scalar_select %p247, %s246, 31
        %s249 = smul.addr %s248, 4
        %s250 = scalar_lea.vmem %s1, %s249
        %s251 = smul.u32 16, %s23
        %s252 = smul.u32 16, %s22
        %p253 = scmp.lt.s32.totalorder %s252, 31
        %s254 = scalar_select %p253, %s252, 31
        %s255 = smul.addr %s254, 4
        %s256 = scalar_lea.vmem %s4, %s255
        %s257 = smul.u32 16, %s22
        %p259 = scmp.eq.s32.totalorder %s23, 0
        // Predicated region
        $region41: #{centrality_gnn_forward.3} parent=35 // pred_check
          %p260 = pneg %p259
        $region42: #{centrality_gnn_forward.3} parent=35 // pred_check_branch
          %262 = sbr.rel (%p260) target = $region44
        $region43: #{centrality_gnn_forward.3} parent=35 // pred_region
          %vm263 = vcmask 261120
          %264 = vst.msk [vmem:[#allocation2] sm:$0xff] %vm263, 0.0
          %265 = vst.msk [vmem:[#allocation2 + $0x8] sm:$0xff] %vm263, 0.0
          %266 = vst.msk [vmem:[#allocation2 + $0x10] sm:$0xff] %vm263, 0.0
          %267 = vst.msk [vmem:[#allocation2 + $0x18] sm:$0xff] %vm263, 0.0
          %268 = vst.msk [vmem:[#allocation2 + $0x20] sm:$0xff] %vm263, 0.0
          %269 = vst.msk [vmem:[#allocation2 + $0x28] sm:$0xff] %vm263, 0.0
          %270 = vst.msk [vmem:[#allocation2 + $0x30] sm:$0xff] %vm263, 0.0
          %271 = vst.msk [vmem:[#allocation2 + $0x38] sm:$0xff] %vm263, 0.0
          %272 = vst.msk [vmem:[#allocation2 + $0x40] sm:$0xff] %vm263, 0.0
          %273 = vst.msk [vmem:[#allocation2 + $0x48] sm:$0xff] %vm263, 0.0
          %274 = vst.msk [vmem:[#allocation2 + $0x50] sm:$0xff] %vm263, 0.0
          %275 = vst.msk [vmem:[#allocation2 + $0x58] sm:$0xff] %vm263, 0.0
          %276 = vst.msk [vmem:[#allocation2 + $0x60] sm:$0xff] %vm263, 0.0
          %277 = vst.msk [vmem:[#allocation2 + $0x68] sm:$0xff] %vm263, 0.0
          %278 = vst.msk [vmem:[#allocation2 + $0x70] sm:$0xff] %vm263, 0.0
          %279 = vst.msk [vmem:[#allocation2 + $0x78] sm:$0xff] %vm263, 0.0
        $region44: #{centrality_gnn_forward.3} parent=35 // pred_fallthru
          _
        %v280 = vld [vmem:[%s250] sm:$0xf]
        %v281 = vld [vmem:[%s250 + $0x4] sm:$0xf]
        %v282 = vld [vmem:[%s250 + $0x8] sm:$0xf]
        %v283 = vld [vmem:[%s250 + $0xc] sm:$0xf]
        %v284 = vld [vmem:[%s250 + $0x10] sm:$0xf]
        %v285 = vld [vmem:[%s250 + $0x14] sm:$0xf]
        %v286 = vld [vmem:[%s250 + $0x18] sm:$0xf]
        %v287 = vld [vmem:[%s250 + $0x1c] sm:$0xf]
        %v288 = vld [vmem:[%s250 + $0x20] sm:$0xf]
        %v289 = vld [vmem:[%s250 + $0x24] sm:$0xf]
        %v290 = vld [vmem:[%s250 + $0x28] sm:$0xf]
        %v291 = vld [vmem:[%s250 + $0x2c] sm:$0xf]
        %v292 = vld [vmem:[%s250 + $0x30] sm:$0xf]
        %v293 = vld [vmem:[%s250 + $0x34] sm:$0xf]
        %v294 = vld [vmem:[%s250 + $0x38] sm:$0xf]
        %v295 = vld [vmem:[%s250 + $0x3c] sm:$0xf]
        %v296 = vld [vmem:[%s2] sm:$0xf]
        %v313 = vunpack.c.l.b16 %v280
        %v314 = vunpack.c.l.b16 %v281
        %v315 = vunpack.c.l.b16 %v282
        %v316 = vunpack.c.l.b16 %v283
        %v317 = vunpack.c.l.b16 %v284
        %v318 = vunpack.c.l.b16 %v285
        %v319 = vunpack.c.l.b16 %v286
        %v320 = vunpack.c.l.b16 %v287
        %v321 = vunpack.c.l.b16 %v288
        %v322 = vunpack.c.l.b16 %v289
        %v323 = vunpack.c.l.b16 %v290
        %v324 = vunpack.c.l.b16 %v291
        %v325 = vunpack.c.l.b16 %v292
        %v326 = vunpack.c.l.b16 %v293
        %v327 = vunpack.c.l.b16 %v294
        %v328 = vunpack.c.l.b16 %v295
        %v329 = vpack.c.b16 %v314, %v313
        %v330 = vpack.c.b16 %v316, %v315
        %v331 = vpack.c.b16 %v318, %v317
        %v332 = vpack.c.b16 %v320, %v319
        %v333 = vpack.c.b16 %v322, %v321
        %v334 = vpack.c.b16 %v324, %v323
        %v335 = vpack.c.b16 %v326, %v325
        %v336 = vpack.c.b16 %v328, %v327
        %vm337 = vcmask 64512
        %v339 = vsel %vm337, %v329, 0
        %v342 = vsel %vm337, %v330, 0
        %v345 = vsel %vm337, %v331, 0
        %v348 = vsel %vm337, %v332, 0
        %v351 = vsel %vm337, %v333, 0
        %v354 = vsel %vm337, %v334, 0
        %v357 = vsel %vm337, %v335, 0
        %v360 = vsel %vm337, %v336, 0
        %vm362 = vcmask 1043456
        %v364 = vsel %vm362, %v296, 0
        %366 = vmatprep.subr.bf16.mxu0 0
        %367 = vmatpush1.bf16.msra.mxu0 0
        %368 = vmatprep.subr.bf16.mxu0 0
        %369 = vmatpush1.bf16.msra.mxu0 0
        %370 = vmatprep.subr.bf16.mxu0 0
        %371 = vmatpush1.bf16.msra.mxu0 0
        %372 = vmatprep.subr.bf16.mxu0 0
        %373 = vmatpush1.bf16.msra.mxu0 0
        %374 = vmatprep.subr.bf16.mxu0 0
        %375 = vmatpush1.bf16.msra.mxu0 0
        %376 = vmatprep.subr.bf16.mxu0 0
        %377 = vmatpush1.bf16.msra.mxu0 0
        %378 = vmatprep.subr.bf16.mxu0 0
        %379 = vmatpush1.bf16.msra.mxu0 0
        %380 = vmatprep.subr.bf16.mxu0 0
        %381 = vmatpush1.bf16.msra.mxu0 %v364
        %382 = vmatprep.subr.bf16.mxu0 0
        %383 = vmatpush2.bf16.msra.mxu0 0
        %384 = vmatprep.subr.bf16.mxu0 0
        %385 = vmatpush2.bf16.msra.mxu0 0
        %386 = vmatprep.subr.bf16.mxu0 0
        %387 = vmatpush2.bf16.msra.mxu0 0
        %388 = vmatprep.subr.bf16.mxu0 0
        %389 = vmatpush2.bf16.msra.mxu0 0
        %390 = vmatprep.subr.bf16.mxu0 0
        %391 = vmatpush2.bf16.msra.mxu0 0
        %392 = vmatprep.subr.bf16.mxu0 0
        %393 = vmatpush2.bf16.msra.mxu0 0
        %394 = vmatprep.subr.bf16.mxu0 0
        %395 = vmatpush2.bf16.msra.mxu0 0
        %396 = vmatprep.subr.bf16.mxu0 0
        %397 = vmatpush2.bf16.msra.mxu0 0
        %398 = vmatprep.mubr.bf16.mxu0 0
        %399 = vmatmul.mubr.bf16.gmra.mxu0 %v339
        %v400 = vpop.f32.mrf.mxu0
        %v401 = vadd.f32 0.0, %v400
        %v402 = vpop.f32.mrf.mxu0
        %v403 = vpop.f32.mrf.mxu0
        %v404 = vadd.f32 0.0, %v403
        %v405 = vpop.f32.mrf.mxu0
        %406 = vmatprep.mubr.bf16.mxu0 0
        %407 = vmatmul.mubr.bf16.gmra.mxu0 %v342
        %v408 = vpop.f32.mrf.mxu0
        %v409 = vadd.f32 0.0, %v408
        %v410 = vpop.f32.mrf.mxu0
        %v411 = vpop.f32.mrf.mxu0
        %v412 = vadd.f32 0.0, %v411
        %v413 = vpop.f32.mrf.mxu0
        %414 = vmatprep.mubr.bf16.mxu0 0
        %415 = vmatmul.mubr.bf16.gmra.mxu0 %v345
        %v416 = vpop.f32.mrf.mxu0
        %v417 = vadd.f32 0.0, %v416
        %v418 = vpop.f32.mrf.mxu0
        %v419 = vpop.f32.mrf.mxu0
        %v420 = vadd.f32 0.0, %v419
        %v421 = vpop.f32.mrf.mxu0
        %422 = vmatprep.mubr.bf16.mxu0 0
        %423 = vmatmul.mubr.bf16.gmra.mxu0 %v348
        %v424 = vpop.f32.mrf.mxu0
        %v425 = vadd.f32 0.0, %v424
        %v426 = vpop.f32.mrf.mxu0
        %v427 = vpop.f32.mrf.mxu0
        %v428 = vadd.f32 0.0, %v427
        %v429 = vpop.f32.mrf.mxu0
        %430 = vmatprep.mubr.bf16.mxu0 0
        %431 = vmatmul.mubr.bf16.gmra.mxu0 %v351
        %v432 = vpop.f32.mrf.mxu0
        %v433 = vadd.f32 0.0, %v432
        %v434 = vpop.f32.mrf.mxu0
        %v435 = vpop.f32.mrf.mxu0
        %v436 = vadd.f32 0.0, %v435
        %v437 = vpop.f32.mrf.mxu0
        %438 = vmatprep.mubr.bf16.mxu0 0
        %439 = vmatmul.mubr.bf16.gmra.mxu0 %v354
        %v440 = vpop.f32.mrf.mxu0
        %v441 = vadd.f32 0.0, %v440
        %v442 = vpop.f32.mrf.mxu0
        %v443 = vpop.f32.mrf.mxu0
        %v444 = vadd.f32 0.0, %v443
        %v445 = vpop.f32.mrf.mxu0
        %446 = vmatprep.mubr.bf16.mxu0 0
        %447 = vmatmul.mubr.bf16.gmra.mxu0 %v357
        %v448 = vpop.f32.mrf.mxu0
        %v449 = vadd.f32 0.0, %v448
        %v450 = vpop.f32.mrf.mxu0
        %v451 = vpop.f32.mrf.mxu0
        %v452 = vadd.f32 0.0, %v451
        %v453 = vpop.f32.mrf.mxu0
        %454 = vmatprep.mubr.bf16.mxu0 0
        %455 = vmatmul.mubr.bf16.gmra.mxu0 %v360
        %v456 = vpop.f32.mrf.mxu0
        %v457 = vadd.f32 0.0, %v456
        %v458 = vpop.f32.mrf.mxu0
        %v459 = vpop.f32.mrf.mxu0
        %v460 = vadd.f32 0.0, %v459
        %v461 = vpop.f32.mrf.mxu0
        %462 = vdwg.mxu0
        %v463 = vld [vmem:[#allocation2] sm:$0xff]
        %v464 = vld [vmem:[#allocation2 + $0x8] sm:$0xff]
        %v465 = vld [vmem:[#allocation2 + $0x10] sm:$0xff]
        %v466 = vld [vmem:[#allocation2 + $0x18] sm:$0xff]
        %v467 = vld [vmem:[#allocation2 + $0x20] sm:$0xff]
        %v468 = vld [vmem:[#allocation2 + $0x28] sm:$0xff]
        %v469 = vld [vmem:[#allocation2 + $0x30] sm:$0xff]
        %v470 = vld [vmem:[#allocation2 + $0x38] sm:$0xff]
        %v471 = vld [vmem:[#allocation2 + $0x40] sm:$0xff]
        %v472 = vld [vmem:[#allocation2 + $0x48] sm:$0xff]
        %v473 = vld [vmem:[#allocation2 + $0x50] sm:$0xff]
        %v474 = vld [vmem:[#allocation2 + $0x58] sm:$0xff]
        %v475 = vld [vmem:[#allocation2 + $0x60] sm:$0xff]
        %v476 = vld [vmem:[#allocation2 + $0x68] sm:$0xff]
        %v477 = vld [vmem:[#allocation2 + $0x70] sm:$0xff]
        %v478 = vld [vmem:[#allocation2 + $0x78] sm:$0xff]
        %v479 = vld [vmem:[%s215] sm:$0xf]
        %v480 = vld [vmem:[%s215 + $0x4] sm:$0xf]
        %v481 = vld [vmem:[%s215 + $0x8] sm:$0xf]
        %v482 = vld [vmem:[%s215 + $0xc] sm:$0xf]
        %v483 = vld [vmem:[%s215 + $0x10] sm:$0xf]
        %v484 = vld [vmem:[%s215 + $0x14] sm:$0xf]
        %v485 = vld [vmem:[%s215 + $0x18] sm:$0xf]
        %v486 = vld [vmem:[%s215 + $0x1c] sm:$0xf]
        %v487 = vld [vmem:[%s215 + $0x20] sm:$0xf]
        %v488 = vld [vmem:[%s215 + $0x24] sm:$0xf]
        %v489 = vld [vmem:[%s215 + $0x28] sm:$0xf]
        %v490 = vld [vmem:[%s215 + $0x2c] sm:$0xf]
        %v491 = vld [vmem:[%s215 + $0x30] sm:$0xf]
        %v492 = vld [vmem:[%s215 + $0x34] sm:$0xf]
        %v493 = vld [vmem:[%s215 + $0x38] sm:$0xf]
        %v494 = vld [vmem:[%s215 + $0x3c] sm:$0xf]
        %v495 = vpack.c.bf16 %v404, %v401
        %v496 = vpack.c.bf16 %v412, %v409
        %v497 = vpack.c.bf16 %v420, %v417
        %v498 = vpack.c.bf16 %v428, %v425
        %v499 = vpack.c.bf16 %v436, %v433
        %v500 = vpack.c.bf16 %v444, %v441
        %v501 = vpack.c.bf16 %v452, %v449
        %v502 = vpack.c.bf16 %v460, %v457
        %v519 = vunpack.c.l.b16 %v479
        %v520 = vunpack.c.l.b16 %v480
        %v521 = vunpack.c.l.b16 %v481
        %v522 = vunpack.c.l.b16 %v482
        %v523 = vunpack.c.l.b16 %v483
        %v524 = vunpack.c.l.b16 %v484
        %v525 = vunpack.c.l.b16 %v485
        %v526 = vunpack.c.l.b16 %v486
        %v527 = vunpack.c.l.b16 %v487
        %v528 = vunpack.c.l.b16 %v488
        %v529 = vunpack.c.l.b16 %v489
        %v530 = vunpack.c.l.b16 %v490
        %v531 = vunpack.c.l.b16 %v491
        %v532 = vunpack.c.l.b16 %v492
        %v533 = vunpack.c.l.b16 %v493
        %v534 = vunpack.c.l.b16 %v494
        %v535 = vpack.c.b16 %v520, %v519
        %v536 = vpack.c.b16 %v522, %v521
        %v537 = vpack.c.b16 %v524, %v523
        %v538 = vpack.c.b16 %v526, %v525
        %v539 = vpack.c.b16 %v528, %v527
        %v540 = vpack.c.b16 %v530, %v529
        %v541 = vpack.c.b16 %v532, %v531
        %v542 = vpack.c.b16 %v534, %v533
        %551 = vmatprep.subr.bf16.mxu0 0
        %552 = vmatpush1.bf16.msra.mxu0 %v502
        %553 = vmatprep.subr.bf16.mxu0 0
        %554 = vmatpush1.bf16.msra.mxu0 %v501
        %555 = vmatprep.subr.bf16.mxu0 0
        %556 = vmatpush1.bf16.msra.mxu0 %v500
        %557 = vmatprep.subr.bf16.mxu0 0
        %558 = vmatpush1.bf16.msra.mxu0 %v499
        %559 = vmatprep.subr.bf16.mxu0 0
        %560 = vmatpush1.bf16.msra.mxu0 %v498
        %561 = vmatprep.subr.bf16.mxu0 0
        %562 = vmatpush1.bf16.msra.mxu0 %v497
        %563 = vmatprep.subr.bf16.mxu0 0
        %564 = vmatpush1.bf16.msra.mxu0 %v496
        %565 = vmatprep.subr.bf16.mxu0 0
        %566 = vmatpush1.bf16.msra.mxu0 %v495
        %567 = vmatprep.subr.bf16.mxu0 0
        %568 = vmatpush2.bf16.msra.mxu0 0
        %569 = vmatprep.subr.bf16.mxu0 0
        %570 = vmatpush2.bf16.msra.mxu0 0
        %571 = vmatprep.subr.bf16.mxu0 0
        %572 = vmatpush2.bf16.msra.mxu0 0
        %573 = vmatprep.subr.bf16.mxu0 0
        %574 = vmatpush2.bf16.msra.mxu0 0
        %575 = vmatprep.subr.bf16.mxu0 0
        %576 = vmatpush2.bf16.msra.mxu0 0
        %577 = vmatprep.subr.bf16.mxu0 0
        %578 = vmatpush2.bf16.msra.mxu0 0
        %579 = vmatprep.subr.bf16.mxu0 0
        %580 = vmatpush2.bf16.msra.mxu0 0
        %581 = vmatprep.subr.bf16.mxu0 0
        %582 = vmatpush2.bf16.msra.mxu0 0
        %583 = vmatprep.mubr.bf16.mxu0 0
        %584 = vmatmul.mubr.bf16.gmra.mxu0 %v535
        %v585 = vpop.f32.mrf.mxu0
        %v586 = vadd.f32 0.0, %v585
        %v587 = vpop.f32.mrf.mxu0
        %v588 = vpop.f32.mrf.mxu0
        %v589 = vadd.f32 0.0, %v588
        %v590 = vpop.f32.mrf.mxu0
        %591 = vmatprep.mubr.bf16.mxu0 0
        %592 = vmatmul.mubr.bf16.gmra.mxu0 %v536
        %v593 = vpop.f32.mrf.mxu0
        %v594 = vadd.f32 0.0, %v593
        %v595 = vpop.f32.mrf.mxu0
        %v596 = vpop.f32.mrf.mxu0
        %v597 = vadd.f32 0.0, %v596
        %v598 = vpop.f32.mrf.mxu0
        %599 = vmatprep.mubr.bf16.mxu0 0
        %600 = vmatmul.mubr.bf16.gmra.mxu0 %v537
        %v601 = vpop.f32.mrf.mxu0
        %v602 = vadd.f32 0.0, %v601
        %v603 = vpop.f32.mrf.mxu0
        %v604 = vpop.f32.mrf.mxu0
        %v605 = vadd.f32 0.0, %v604
        %v606 = vpop.f32.mrf.mxu0
        %607 = vmatprep.mubr.bf16.mxu0 0
        %608 = vmatmul.mubr.bf16.gmra.mxu0 %v538
        %v609 = vpop.f32.mrf.mxu0
        %v610 = vadd.f32 0.0, %v609
        %v611 = vpop.f32.mrf.mxu0
        %v612 = vpop.f32.mrf.mxu0
        %v613 = vadd.f32 0.0, %v612
        %v614 = vpop.f32.mrf.mxu0
        %615 = vmatprep.mubr.bf16.mxu0 0
        %616 = vmatmul.mubr.bf16.gmra.mxu0 %v539
        %v617 = vpop.f32.mrf.mxu0
        %v618 = vadd.f32 0.0, %v617
        %v619 = vpop.f32.mrf.mxu0
        %v620 = vpop.f32.mrf.mxu0
        %v621 = vadd.f32 0.0, %v620
        %v622 = vpop.f32.mrf.mxu0
        %623 = vmatprep.mubr.bf16.mxu0 0
        %624 = vmatmul.mubr.bf16.gmra.mxu0 %v540
        %v625 = vpop.f32.mrf.mxu0
        %v626 = vadd.f32 0.0, %v625
        %v627 = vpop.f32.mrf.mxu0
        %v628 = vpop.f32.mrf.mxu0
        %v629 = vadd.f32 0.0, %v628
        %v630 = vpop.f32.mrf.mxu0
        %631 = vmatprep.mubr.bf16.mxu0 0
        %632 = vmatmul.mubr.bf16.gmra.mxu0 %v541
        %v633 = vpop.f32.mrf.mxu0
        %v634 = vadd.f32 0.0, %v633
        %v635 = vpop.f32.mrf.mxu0
        %v636 = vpop.f32.mrf.mxu0
        %v637 = vadd.f32 0.0, %v636
        %v638 = vpop.f32.mrf.mxu0
        %639 = vmatprep.mubr.bf16.mxu0 0
        %640 = vmatmul.mubr.bf16.gmra.mxu0 %v542
        %v641 = vpop.f32.mrf.mxu0
        %v642 = vadd.f32 0.0, %v641
        %v643 = vpop.f32.mrf.mxu0
        %v644 = vpop.f32.mrf.mxu0
        %v645 = vadd.f32 0.0, %v644
        %v646 = vpop.f32.mrf.mxu0
        %647 = vdwg.mxu0
        %v648 = vadd.f32 %v463, %v586
        %v649 = vadd.f32 %v464, %v589
        %v650 = vadd.f32 %v465, %v594
        %v651 = vadd.f32 %v466, %v597
        %v652 = vadd.f32 %v467, %v602
        %v653 = vadd.f32 %v468, %v605
        %v654 = vadd.f32 %v469, %v610
        %v655 = vadd.f32 %v470, %v613
        %v656 = vadd.f32 %v471, %v618
        %v657 = vadd.f32 %v472, %v621
        %v658 = vadd.f32 %v473, %v626
        %v659 = vadd.f32 %v474, %v629
        %v660 = vadd.f32 %v475, %v634
        %v661 = vadd.f32 %v476, %v637
        %v662 = vadd.f32 %v477, %v642
        %v663 = vadd.f32 %v478, %v645
        %vm664 = vcmask 261120
        %665 = vst.msk [vmem:[#allocation2] sm:$0xff] %vm664, %v648
        %666 = vst.msk [vmem:[#allocation2 + $0x8] sm:$0xff] %vm664, %v649
        %667 = vst.msk [vmem:[#allocation2 + $0x10] sm:$0xff] %vm664, %v650
        %668 = vst.msk [vmem:[#allocation2 + $0x18] sm:$0xff] %vm664, %v651
        %669 = vst.msk [vmem:[#allocation2 + $0x20] sm:$0xff] %vm664, %v652
        %670 = vst.msk [vmem:[#allocation2 + $0x28] sm:$0xff] %vm664, %v653
        %671 = vst.msk [vmem:[#allocation2 + $0x30] sm:$0xff] %vm664, %v654
        %672 = vst.msk [vmem:[#allocation2 + $0x38] sm:$0xff] %vm664, %v655
        %673 = vst.msk [vmem:[#allocation2 + $0x40] sm:$0xff] %vm664, %v656
        %674 = vst.msk [vmem:[#allocation2 + $0x48] sm:$0xff] %vm664, %v657
        %675 = vst.msk [vmem:[#allocation2 + $0x50] sm:$0xff] %vm664, %v658
        %676 = vst.msk [vmem:[#allocation2 + $0x58] sm:$0xff] %vm664, %v659
        %677 = vst.msk [vmem:[#allocation2 + $0x60] sm:$0xff] %vm664, %v660
        %678 = vst.msk [vmem:[#allocation2 + $0x68] sm:$0xff] %vm664, %v661
        %679 = vst.msk [vmem:[#allocation2 + $0x70] sm:$0xff] %vm664, %v662
        %680 = vst.msk [vmem:[#allocation2 + $0x78] sm:$0xff] %vm664, %v663
        %p681 = scmp.eq.s32.totalorder %s23, 1
        // Predicated region
        $region45: #{centrality_gnn_forward.3} parent=35 // pred_check
          %p682 = pneg %p681
        $region46: #{centrality_gnn_forward.3} parent=35 // pred_check_branch
          %684 = sbr.rel (%p682) target = $region48
        $region47: #{centrality_gnn_forward.3} parent=35 // pred_region
          %v685 = vld [vmem:[#allocation2] sm:$0xff]
          %v686 = vld [vmem:[#allocation2 + $0x8] sm:$0xff]
          %v687 = vld [vmem:[#allocation2 + $0x10] sm:$0xff]
          %v688 = vld [vmem:[#allocation2 + $0x18] sm:$0xff]
          %v689 = vld [vmem:[#allocation2 + $0x20] sm:$0xff]
          %v690 = vld [vmem:[#allocation2 + $0x28] sm:$0xff]
          %v691 = vld [vmem:[#allocation2 + $0x30] sm:$0xff]
          %v692 = vld [vmem:[#allocation2 + $0x38] sm:$0xff]
          %v693 = vld [vmem:[#allocation2 + $0x40] sm:$0xff]
          %v694 = vld [vmem:[#allocation2 + $0x48] sm:$0xff]
          %v695 = vld [vmem:[#allocation2 + $0x50] sm:$0xff]
          %v696 = vld [vmem:[#allocation2 + $0x58] sm:$0xff]
          %v697 = vld [vmem:[#allocation2 + $0x60] sm:$0xff]
          %v698 = vld [vmem:[#allocation2 + $0x68] sm:$0xff]
          %v699 = vld [vmem:[#allocation2 + $0x70] sm:$0xff]
          %v700 = vld [vmem:[#allocation2 + $0x78] sm:$0xff]
          %v701 = vld [vmem:[%s3] sm:$0x1]
          %v703 = vlaneseq
          %v704 = vshrl.u32 %v703, 7
          %v705 = vsub.s32 0, %v704
          %v706 = vrot.slane %v701, %v705
          %v708 = vadd.f32 %v685, %v706
          %v709 = vadd.f32 %v686, %v706
          %v710 = vadd.f32 %v687, %v706
          %v711 = vadd.f32 %v688, %v706
          %v712 = vadd.f32 %v689, %v706
          %v713 = vadd.f32 %v690, %v706
          %v714 = vadd.f32 %v691, %v706
          %v715 = vadd.f32 %v692, %v706
          %v716 = vadd.f32 %v693, %v706
          %v717 = vadd.f32 %v694, %v706
          %v718 = vadd.f32 %v695, %v706
          %v719 = vadd.f32 %v696, %v706
          %v720 = vadd.f32 %v697, %v706
          %v721 = vadd.f32 %v698, %v706
          %v722 = vadd.f32 %v699, %v706
          %v723 = vadd.f32 %v700, %v706
          %v724 = vmax.f32 %v708, 0.0
          %v725 = vmax.f32 %v709, 0.0
          %v726 = vmax.f32 %v710, 0.0
          %v727 = vmax.f32 %v711, 0.0
          %v728 = vmax.f32 %v712, 0.0
          %v729 = vmax.f32 %v713, 0.0
          %v730 = vmax.f32 %v714, 0.0
          %v731 = vmax.f32 %v715, 0.0
          %v732 = vmax.f32 %v716, 0.0
          %v733 = vmax.f32 %v717, 0.0
          %v734 = vmax.f32 %v718, 0.0
          %v735 = vmax.f32 %v719, 0.0
          %v736 = vmax.f32 %v720, 0.0
          %v737 = vmax.f32 %v721, 0.0
          %v738 = vmax.f32 %v722, 0.0
          %v739 = vmax.f32 %v723, 0.0
          %v740 = vpack.c.bf16 %v725, %v724
          %v741 = vpack.c.bf16 %v727, %v726
          %v742 = vpack.c.bf16 %v729, %v728
          %v743 = vpack.c.bf16 %v731, %v730
          %v744 = vpack.c.bf16 %v733, %v732
          %v745 = vpack.c.bf16 %v735, %v734
          %v746 = vpack.c.bf16 %v737, %v736
          %v747 = vpack.c.bf16 %v739, %v738
          %v756 = vunpack.c.l.b16 %v740
          %v757 = vunpack.c.h.b16 %v740
          %v758 = vunpack.c.l.b16 %v741
          %v759 = vunpack.c.h.b16 %v741
          %v760 = vunpack.c.l.b16 %v742
          %v761 = vunpack.c.h.b16 %v742
          %v762 = vunpack.c.l.b16 %v743
          %v763 = vunpack.c.h.b16 %v743
          %v764 = vunpack.c.l.b16 %v744
          %v765 = vunpack.c.h.b16 %v744
          %v766 = vunpack.c.l.b16 %v745
          %v767 = vunpack.c.h.b16 %v745
          %v768 = vunpack.c.l.b16 %v746
          %v769 = vunpack.c.h.b16 %v746
          %v770 = vunpack.c.l.b16 %v747
          %v771 = vunpack.c.h.b16 %v747
          %v772 = vpack.c.b16 %v756, %v756
          %v773 = vpack.c.b16 %v757, %v757
          %v774 = vpack.c.b16 %v758, %v758
          %v775 = vpack.c.b16 %v759, %v759
          %v776 = vpack.c.b16 %v760, %v760
          %v777 = vpack.c.b16 %v761, %v761
          %v778 = vpack.c.b16 %v762, %v762
          %v779 = vpack.c.b16 %v763, %v763
          %v780 = vpack.c.b16 %v764, %v764
          %v781 = vpack.c.b16 %v765, %v765
          %v782 = vpack.c.b16 %v766, %v766
          %v783 = vpack.c.b16 %v767, %v767
          %v784 = vpack.c.b16 %v768, %v768
          %v785 = vpack.c.b16 %v769, %v769
          %v786 = vpack.c.b16 %v770, %v770
          %v787 = vpack.c.b16 %v771, %v771
          %vm804 = vcmask 257024
          %805 = vst.msk [vmem:[%s256] sm:$0xf] %vm804, %v772
          %806 = vst.msk [vmem:[%s256 + $0x4] sm:$0xf] %vm804, %v773
          %807 = vst.msk [vmem:[%s256 + $0x8] sm:$0xf] %vm804, %v774
          %808 = vst.msk [vmem:[%s256 + $0xc] sm:$0xf] %vm804, %v775
          %809 = vst.msk [vmem:[%s256 + $0x10] sm:$0xf] %vm804, %v776
          %810 = vst.msk [vmem:[%s256 + $0x14] sm:$0xf] %vm804, %v777
          %811 = vst.msk [vmem:[%s256 + $0x18] sm:$0xf] %vm804, %v778
          %812 = vst.msk [vmem:[%s256 + $0x1c] sm:$0xf] %vm804, %v779
          %813 = vst.msk [vmem:[%s256 + $0x20] sm:$0xf] %vm804, %v780
          %814 = vst.msk [vmem:[%s256 + $0x24] sm:$0xf] %vm804, %v781
          %815 = vst.msk [vmem:[%s256 + $0x28] sm:$0xf] %vm804, %v782
          %816 = vst.msk [vmem:[%s256 + $0x2c] sm:$0xf] %vm804, %v783
          %817 = vst.msk [vmem:[%s256 + $0x30] sm:$0xf] %vm804, %v784
          %818 = vst.msk [vmem:[%s256 + $0x34] sm:$0xf] %vm804, %v785
          %819 = vst.msk [vmem:[%s256 + $0x38] sm:$0xf] %vm804, %v786
          %820 = vst.msk [vmem:[%s256 + $0x3c] sm:$0xf] %vm804, %v787
        $region48: #{centrality_gnn_forward.3} parent=35 // pred_fallthru
          _
        %s821 = smul.u32 16, %s22
        %p822 = scmp.lt.s32.totalorder %s821, 31
        %s823 = scalar_select %p822, %s821, 31
        %s824 = smul.addr %s823, 4
        %s825 = scalar_lea.vmem %s4, %s824
        // Predicated region
        $region49: #{centrality_gnn_forward.3} parent=35 // pred_check
          %p826 = pneg %p144
        $region50: #{centrality_gnn_forward.3} parent=35 // pred_check_branch
          %828 = sbr.rel (%p826) target = $region52
        $region51: #{centrality_gnn_forward.3} parent=35 // pred_region
          %s829 = smul.u32 16, %s22
        $region52: #{centrality_gnn_forward.3} parent=35 // pred_fallthru
          _
      $region36: #{centrality_gnn_forward.3} parent=5 // pred_fallthru
        _
      %p830 = scmp.le.s32.totalorder 2, %s13
      // Predicated region
      $region53: #{centrality_gnn_forward.3} parent=5 // pred_check
        %p831 = pneg %p830
      $region54: #{centrality_gnn_forward.3} parent=5 // pred_check_branch
        %833 = sbr.rel (%p831) target = $region56
      $region55: #{centrality_gnn_forward.3} parent=5 // pred_region
        %s834 = ssub.s32 %s13, 2
        // Predicated region
        $region57: #{centrality_gnn_forward.3} parent=55 // pred_check
          %p835 = pneg %p150
        $region58: #{centrality_gnn_forward.3} parent=55 // pred_check_branch
          %837 = sbr.rel (%p835) target = $region60
        $region59: #{centrality_gnn_forward.3} parent=55 // pred_region
          %s838 = smul.u32 16, %s24
          %p839 = scmp.lt.s32.totalorder %s838, 31
          %s840 = scalar_select %p839, %s838, 31
          %s841 = smul.addr %s840, 4
          %s842 = scalar_lea.vmem %s4, %s841
        $region60: #{centrality_gnn_forward.3} parent=55 // pred_fallthru
          _
      $region56: #{centrality_gnn_forward.3} parent=5 // pred_fallthru
        _
    $region6: #{centrality_gnn_forward.3} parent=1 // loop_footer
      %s17 = sadd.s32 1, %s13
    $region7: #{centrality_gnn_forward.3} parent=1 // loop_footer_branch
      %12 = sbr.rel target = $region3
    $region8: #{centrality_gnn_forward.3} parent=1 // loop_exit
      _
    %843 = vsyncpa [#allocation4], 1
    %s844 = scalar_lea.sflag [#allocation4], 1
    %845 = vsyncpa %s844, 1

// kernel: centrality_gnn_forward.4
$region0: #{centrality_gnn_forward.4}
  #allocation0 [shape = 'u32[]', space=smem, size = 0x4, offset = 0x4, fixed_abs, tag = 'smem constant byte address 0x4 - core index']
  #allocation1 [shape = 'u32[144,128]{1,0:T(1,128)}', space=vmem, size = 0x12000, scoped, tag = 'internal scratch']
  #allocation2 [shape = 'f32[128,32]{1,0:T(8,128)}', space=vmem, size = 0x10000, scoped, tag = 'scratch operand']
  %s0 = inlined_call_operand.vmem [shape: bf16[256,256], index: 0, kind: input, shape index: {}]
  %s1 = inlined_call_operand.vmem [shape: bf16[256,32], index: 1, kind: input, shape index: {}]
  %s2 = inlined_call_operand.vmem [shape: bf16[32,32], index: 2, kind: input, shape index: {}]
  %s3 = inlined_call_operand.vmem [shape: f32[1,32], index: 3, kind: input, shape index: {}]
  %s4 = inlined_call_operand.vmem [shape: bf16[256,32], index: 4, kind: output, shape index: {}]
  %s5 = sld [smem:[#allocation0]]
  $region98: #{centrality_gnn_forward.4} parent=0
    _
  %s7 = ssub.s32 1, %s5
  %s8 = scalar_select 0, %s7, %s5
  $region1: #{centrality_gnn_forward.4} parent=0
    #allocation3 [shape = 'u8[65536]{0}', space=vmem, size = 0x10000, scoped, tag = 'input window, operand 0']
    loop: start=0, step=1, limit=6
    $region2: #{centrality_gnn_forward.4} parent=1 // loop_pre_header
      _
    $region3: #{centrality_gnn_forward.4} parent=1 // loop_header
      %s10 = sphi 0, %s14
      %p11 = scmp.ge.s32.totalorder %s10, 6
      %s17 = sphi 0, %s29
      %s18 = sphi 0, %s25
      %s19 = sphi 0, %s17
      %s20 = sphi 0, %s18
      %s21 = sphi 0, %s19
      %s22 = sphi 0, %s20
      %s34 = sphi 0, %s36
      %s37 = sphi 0, %s34
      %s38 = sphi 0, %s37
      %s54 = sphi 0, %s38
      %s60 = sphi 0, %s62
      %s63 = sphi 0, %s60
      %s64 = sphi 0, %s63
      %s80 = sphi 0, %s64
      %s84 = sphi 0, %s84
      %s86 = sphi 0, %s84
      %s87 = sphi 0, %s86
      %s101 = sphi 0, %s87
      %s105 = sphi 0, %s105
      %s107 = sphi 0, %s105
      %s108 = sphi 0, %s107
      %s122 = sphi 0, %s108
      %s128 = sphi 0, %s130
      %s131 = sphi 0, %s128
      %s132 = sphi 0, %s131
      %s148 = sphi 0, %s132
    $region4: #{centrality_gnn_forward.4} parent=1 // loop_header_branch
      %13 = sbr.rel (%p11) target = $region8
    $region5: #{centrality_gnn_forward.4} parent=1 // loop_body
      %s15 = ssub.s32 %s10, 1
      %s16 = ssub.s32 %s10, 2
      %s23 = sadd.s32 1, %s18
      %p24 = scmp.ge.s32.totalorder %s23, 2
      %s25 = scalar_select %p24, 0, %s23
      %s26 = sadd.s32 1, %s17
      %s27 = scalar_select %p24, %s26, %s17
      %p28 = scmp.ge.s32.totalorder %s27, 2
      %s29 = scalar_select %p28, 0, %s27
      %s30 = ssub.s32 %s17, %s29
      %s31 = ssub.s32 %s18, %s25
      %s32 = sor.u32 %s30, %s31
      %p33 = scmp.eq.s32.totalorder %s32, 0
      %s35 = sadd.s32 %s34, 1
      %s36 = scalar_select %p33, %s34, %s35
      %p39 = pneg %p33
      %p40 = scmp.eq.s32.totalorder %s10, 3
      %p41 = por %p39, %p40
      %p42 = scmp.ne.s32.totalorder %s34, %s37
      %p43 = scmp.eq.s32.totalorder %s10, 0
      %p44 = por %p42, %p43
      %p45 = scmp.ne.s32.totalorder %s34, %s37
      %p46 = scmp.eq.s32.totalorder %s15, 3
      %p47 = por %p45, %p46
      %p48 = scmp.ne.s32.totalorder %s37, %s38
      %p49 = scmp.eq.s32.totalorder %s15, 0
      %p50 = por %p48, %p49
      %p51 = scmp.ne.s32.totalorder %s37, %s38
      %p52 = scmp.eq.s32.totalorder %s16, 3
      %p53 = por %p51, %p52
      %p55 = scmp.ne.s32.totalorder %s38, %s54
      %p56 = scmp.eq.s32.totalorder %s16, 0
      %p57 = por %p55, %p56
      %s58 = ssub.s32 %s18, %s25
      %p59 = scmp.eq.s32.totalorder %s58, 0
      %s61 = sadd.s32 %s60, 1
      %s62 = scalar_select %p59, %s60, %s61
      %p65 = pneg %p59
      %p66 = scmp.eq.s32.totalorder %s10, 3
      %p67 = por %p65, %p66
      %p68 = scmp.ne.s32.totalorder %s60, %s63
      %p69 = scmp.eq.s32.totalorder %s10, 0
      %p70 = por %p68, %p69
      %p71 = scmp.ne.s32.totalorder %s60, %s63
      %p72 = scmp.eq.s32.totalorder %s15, 3
      %p73 = por %p71, %p72
      %p74 = scmp.ne.s32.totalorder %s63, %s64
      %p75 = scmp.eq.s32.totalorder %s15, 0
      %p76 = por %p74, %p75
      %p77 = scmp.ne.s32.totalorder %s63, %s64
      %p78 = scmp.eq.s32.totalorder %s16, 3
      %p79 = por %p77, %p78
      %p81 = scmp.ne.s32.totalorder %s64, %s80
      %p82 = scmp.eq.s32.totalorder %s16, 0
      %p83 = por %p81, %p82
      %s85 = sadd.s32 %s84, 1
      %p88 = scmp.eq.s32.totalorder %s10, 3
      %p89 = scmp.ne.s32.totalorder %s84, %s86
      %p90 = scmp.eq.s32.totalorder %s10, 0
      %p91 = por %p89, %p90
      %p92 = scmp.ne.s32.totalorder %s84, %s86
      %p93 = scmp.eq.s32.totalorder %s15, 3
      %p94 = por %p92, %p93
      %p95 = scmp.ne.s32.totalorder %s86, %s87
      %p96 = scmp.eq.s32.totalorder %s15, 0
      %p97 = por %p95, %p96
      %p98 = scmp.ne.s32.totalorder %s86, %s87
      %p99 = scmp.eq.s32.totalorder %s16, 3
      %p100 = por %p98, %p99
      %p102 = scmp.ne.s32.totalorder %s87, %s101
      %p103 = scmp.eq.s32.totalorder %s16, 0
      %p104 = por %p102, %p103
      %s106 = sadd.s32 %s105, 1
      %p109 = scmp.eq.s32.totalorder %s10, 3
      %p110 = scmp.ne.s32.totalorder %s105, %s107
      %p111 = scmp.eq.s32.totalorder %s10, 0
      %p112 = por %p110, %p111
      %p113 = scmp.ne.s32.totalorder %s105, %s107
      %p114 = scmp.eq.s32.totalorder %s15, 3
      %p115 = por %p113, %p114
      %p116 = scmp.ne.s32.totalorder %s107, %s108
      %p117 = scmp.eq.s32.totalorder %s15, 0
      %p118 = por %p116, %p117
      %p119 = scmp.ne.s32.totalorder %s107, %s108
      %p120 = scmp.eq.s32.totalorder %s16, 3
      %p121 = por %p119, %p120
      %p123 = scmp.ne.s32.totalorder %s108, %s122
      %p124 = scmp.eq.s32.totalorder %s16, 0
      %p125 = por %p123, %p124
      %s126 = ssub.s32 %s17, %s29
      %p127 = scmp.eq.s32.totalorder %s126, 0
      %s129 = sadd.s32 %s128, 1
      %s130 = scalar_select %p127, %s128, %s129
      %p133 = pneg %p127
      %p134 = scmp.eq.s32.totalorder %s10, 3
      %p135 = por %p133, %p134
      %p136 = scmp.ne.s32.totalorder %s128, %s131
      %p137 = scmp.eq.s32.totalorder %s10, 0
      %p138 = por %p136, %p137
      %p139 = scmp.ne.s32.totalorder %s128, %s131
      %p140 = scmp.eq.s32.totalorder %s15, 3
      %p141 = por %p139, %p140
      %p142 = scmp.ne.s32.totalorder %s131, %s132
      %p143 = scmp.eq.s32.totalorder %s15, 0
      %p144 = por %p142, %p143
      %p145 = scmp.ne.s32.totalorder %s131, %s132
      %p146 = scmp.eq.s32.totalorder %s16, 3
      %p147 = por %p145, %p146
      %p149 = scmp.ne.s32.totalorder %s132, %s148
      %p150 = scmp.eq.s32.totalorder %s16, 0
      %p151 = por %p149, %p150
      %p152 = scmp.le.s32.totalorder 1, %s10
      %p153 = scmp.lt.s32.totalorder %s10, 5
      %p154 = pnand %p152, %p153
      %p155 = pneg %p154
      // Predicated region
      $region9: #{centrality_gnn_forward.4} parent=5 // pred_check
        _
      $region10: #{centrality_gnn_forward.4} parent=5 // pred_check_branch
        %157 = sbr.rel (%p154) target = $region12
      $region11: #{centrality_gnn_forward.4} parent=5 // pred_region
        %s158 = ssub.s32 %s10, 1
        // Predicated region
        $region13: #{centrality_gnn_forward.4} parent=11 // pred_check
          %p159 = pneg %p97
        $region14: #{centrality_gnn_forward.4} parent=11 // pred_check_branch
          %161 = sbr.rel (%p159) target = $region16
        $region15: #{centrality_gnn_forward.4} parent=11 // pred_region
          _
        $region16: #{centrality_gnn_forward.4} parent=11 // pred_fallthru
          _
        // Predicated region
        $region17: #{centrality_gnn_forward.4} parent=11 // pred_check
          %p162 = pneg %p118
        $region18: #{centrality_gnn_forward.4} parent=11 // pred_check_branch
          %164 = sbr.rel (%p162) target = $region20
        $region19: #{centrality_gnn_forward.4} parent=11 // pred_region
          _
        $region20: #{centrality_gnn_forward.4} parent=11 // pred_fallthru
          _
      $region12: #{centrality_gnn_forward.4} parent=5 // pred_fallthru
        _
      %p165 = scmp.lt.s32.totalorder %s10, 4
      // Predicated region
      $region21: #{centrality_gnn_forward.4} parent=5 // pred_check
        %p166 = pneg %p165
      $region22: #{centrality_gnn_forward.4} parent=5 // pred_check_branch
        %168 = sbr.rel (%p166) target = $region24
      $region23: #{centrality_gnn_forward.4} parent=5 // pred_region
        // Predicated region
        $region25: #{centrality_gnn_forward.4} parent=23 // pred_check
          %p169 = pneg %p44
        $region26: #{centrality_gnn_forward.4} parent=23 // pred_check_branch
          %171 = sbr.rel (%p169) target = $region28
        $region27: #{centrality_gnn_forward.4} parent=23 // pred_region
          %s172 = sand.u32 %s34, 1
          %s173 = sand.u32 %s34, 1
          %s174 = smul.addr %s173, 64
          %s175 = scalar_lea.vmem [#allocation3], %s174
          %s176 = smul.u32 16, %s17
          %s177 = smul.addr %s176, 2
          %s178 = sadd.s32 %s18, %s177
          %s179 = smul.addr %s178, 4
          %s180 = scalar_lea.vmem %s0, %s179
          // Predicated region
          $region29: #{centrality_gnn_forward.4} parent=27 // pred_check
            _
          $region30: #{centrality_gnn_forward.4} parent=27 // pred_check_branch
            %182 = sbr.rel (0) target = $region32
          $region31: #{centrality_gnn_forward.4} parent=27 // pred_region
            // Predicated region
            $region33: #{centrality_gnn_forward.4} parent=31 // pred_check
              _
            $region34: #{centrality_gnn_forward.4} parent=31 // pred_check_branch
              %184 = sbr.rel target = $region36
            $region35: #{centrality_gnn_forward.4} parent=31 // pred_region
              // Predicated region
              $region48: #{centrality_gnn_forward.4} parent=35 // pred_check
                _
              $region49: #{centrality_gnn_forward.4} parent=35 // pred_check_branch
                %230 = sbr.rel (0) target = $region51
              $region50: #{centrality_gnn_forward.4} parent=35 // pred_region
                loop: start=0, step=1, limit=1
                $region52: #{centrality_gnn_forward.4} parent=50 // loop_pre_header
                  _
                $region53: #{centrality_gnn_forward.4} parent=50 // loop_header
                  %s232 = sphi 0, %s236
                  %p233 = scmp.ge.s32.totalorder %s232, 1
                  %s237 = sphi %s180, %s180
                  %s238 = sphi %s175, %s175
                $region54: #{centrality_gnn_forward.4} parent=50 // loop_header_branch
                  %235 = sbr.rel (%p233) target = $region58
                $region55: #{centrality_gnn_forward.4} parent=50 // loop_body
                  _
                $region56: #{centrality_gnn_forward.4} parent=50 // loop_footer
                  %s236 = sadd.s32 1, %s232
                $region57: #{centrality_gnn_forward.4} parent=50 // loop_footer_branch
                  %231 = sbr.rel target = $region53
                $region58: #{centrality_gnn_forward.4} parent=50 // loop_exit
                  _
                %s240 = ssub.s32 16, 1
                loop: start=0, step=1, limit=1
                $region59: #{centrality_gnn_forward.4} parent=50 // loop_pre_header
                  _
                $region60: #{centrality_gnn_forward.4} parent=50 // loop_header
                  %s242 = sphi 0, %s246
                  %p243 = scmp.ge.s32.totalorder %s242, 1
                  %s247 = sphi %s180, %s180
                  %s248 = sphi %s175, %s175
                $region61: #{centrality_gnn_forward.4} parent=50 // loop_header_branch
                  %245 = sbr.rel (%p243) target = $region65
                $region62: #{centrality_gnn_forward.4} parent=50 // loop_body
                  %v249 = vld [vmem:[%s247] sm:%s240]
                  %250 = vst [vmem:[%s248] sm:%s240] %v249
                  %v251 = vld [vmem:[%s247 + $0x8] sm:%s240]
                  %252 = vst [vmem:[%s248 + $0x4] sm:%s240] %v251
                  %v253 = vld [vmem:[%s247 + $0x10] sm:%s240]
                  %254 = vst [vmem:[%s248 + $0x8] sm:%s240] %v253
                  %v255 = vld [vmem:[%s247 + $0x18] sm:%s240]
                  %256 = vst [vmem:[%s248 + $0xc] sm:%s240] %v255
                  %v257 = vld [vmem:[%s247 + $0x20] sm:%s240]
                  %258 = vst [vmem:[%s248 + $0x10] sm:%s240] %v257
                  %v259 = vld [vmem:[%s247 + $0x28] sm:%s240]
                  %260 = vst [vmem:[%s248 + $0x14] sm:%s240] %v259
                  %v261 = vld [vmem:[%s247 + $0x30] sm:%s240]
                  %262 = vst [vmem:[%s248 + $0x18] sm:%s240] %v261
                  %v263 = vld [vmem:[%s247 + $0x38] sm:%s240]
                  %264 = vst [vmem:[%s248 + $0x1c] sm:%s240] %v263
                  %v265 = vld [vmem:[%s247 + $0x40] sm:%s240]
                  %266 = vst [vmem:[%s248 + $0x20] sm:%s240] %v265
                  %v267 = vld [vmem:[%s247 + $0x48] sm:%s240]
                  %268 = vst [vmem:[%s248 + $0x24] sm:%s240] %v267
                  %v269 = vld [vmem:[%s247 + $0x50] sm:%s240]
                  %270 = vst [vmem:[%s248 + $0x28] sm:%s240] %v269
                  %v271 = vld [vmem:[%s247 + $0x58] sm:%s240]
                  %272 = vst [vmem:[%s248 + $0x2c] sm:%s240] %v271
                  %v273 = vld [vmem:[%s247 + $0x60] sm:%s240]
                  %274 = vst [vmem:[%s248 + $0x30] sm:%s240] %v273
                  %v275 = vld [vmem:[%s247 + $0x68] sm:%s240]
                  %276 = vst [vmem:[%s248 + $0x34] sm:%s240] %v275
                  %v277 = vld [vmem:[%s247 + $0x70] sm:%s240]
                  %278 = vst [vmem:[%s248 + $0x38] sm:%s240] %v277
                  %v279 = vld [vmem:[%s247 + $0x78] sm:%s240]
                  %280 = vst [vmem:[%s248 + $0x3c] sm:%s240] %v279
                $region63: #{centrality_gnn_forward.4} parent=50 // loop_footer
                  %s246 = sadd.s32 1, %s242
                $region64: #{centrality_gnn_forward.4} parent=50 // loop_footer_branch
                  %241 = sbr.rel target = $region60
                $region65: #{centrality_gnn_forward.4} parent=50 // loop_exit
                  _
              $region51: #{centrality_gnn_forward.4} parent=35 // pred_fallthru
                _
            $region36: #{centrality_gnn_forward.4} parent=31 // pred_fallthru
              _
            // Predicated region
            $region37: #{centrality_gnn_forward.4} parent=31 // pred_check
              _
            $region38: #{centrality_gnn_forward.4} parent=31 // pred_check_branch
              %186 = sbr.rel (0) target = $region40
            $region39: #{centrality_gnn_forward.4} parent=31 // pred_region
              %s188 = ssub.s32 16, 1
              loop: start=0, step=1, limit=1
              $region41: #{centrality_gnn_forward.4} parent=39 // loop_pre_header
                _
              $region42: #{centrality_gnn_forward.4} parent=39 // loop_header
                %s190 = sphi 0, %s194
                %p191 = scmp.ge.s32.totalorder %s190, 1
                %s195 = sphi %s180, %s180
                %s196 = sphi %s175, %s175
              $region43: #{centrality_gnn_forward.4} parent=39 // loop_header_branch
                %193 = sbr.rel (%p191) target = $region47
              $region44: #{centrality_gnn_forward.4} parent=39 // loop_body
                %v197 = vld [vmem:[%s195] sm:%s188]
                %198 = vst [vmem:[%s196] sm:%s188] %v197
                %v199 = vld [vmem:[%s195 + $0x8] sm:%s188]
                %200 = vst [vmem:[%s196 + $0x4] sm:%s188] %v199
                %v201 = vld [vmem:[%s195 + $0x10] sm:%s188]
                %202 = vst [vmem:[%s196 + $0x8] sm:%s188] %v201
                %v203 = vld [vmem:[%s195 + $0x18] sm:%s188]
                %204 = vst [vmem:[%s196 + $0xc] sm:%s188] %v203
                %v205 = vld [vmem:[%s195 + $0x20] sm:%s188]
                %206 = vst [vmem:[%s196 + $0x10] sm:%s188] %v205
                %v207 = vld [vmem:[%s195 + $0x28] sm:%s188]
                %208 = vst [vmem:[%s196 + $0x14] sm:%s188] %v207
                %v209 = vld [vmem:[%s195 + $0x30] sm:%s188]
                %210 = vst [vmem:[%s196 + $0x18] sm:%s188] %v209
                %v211 = vld [vmem:[%s195 + $0x38] sm:%s188]
                %212 = vst [vmem:[%s196 + $0x1c] sm:%s188] %v211
                %v213 = vld [vmem:[%s195 + $0x40] sm:%s188]
                %214 = vst [vmem:[%s196 + $0x20] sm:%s188] %v213
                %v215 = vld [vmem:[%s195 + $0x48] sm:%s188]
                %216 = vst [vmem:[%s196 + $0x24] sm:%s188] %v215
                %v217 = vld [vmem:[%s195 + $0x50] sm:%s188]
                %218 = vst [vmem:[%s196 + $0x28] sm:%s188] %v217
                %v219 = vld [vmem:[%s195 + $0x58] sm:%s188]
                %220 = vst [vmem:[%s196 + $0x2c] sm:%s188] %v219
                %v221 = vld [vmem:[%s195 + $0x60] sm:%s188]
                %222 = vst [vmem:[%s196 + $0x30] sm:%s188] %v221
                %v223 = vld [vmem:[%s195 + $0x68] sm:%s188]
                %224 = vst [vmem:[%s196 + $0x34] sm:%s188] %v223
                %v225 = vld [vmem:[%s195 + $0x70] sm:%s188]
                %226 = vst [vmem:[%s196 + $0x38] sm:%s188] %v225
                %v227 = vld [vmem:[%s195 + $0x78] sm:%s188]
                %228 = vst [vmem:[%s196 + $0x3c] sm:%s188] %v227
              $region45: #{centrality_gnn_forward.4} parent=39 // loop_footer
                %s194 = sadd.s32 1, %s190
              $region46: #{centrality_gnn_forward.4} parent=39 // loop_footer_branch
                %189 = sbr.rel target = $region42
              $region47: #{centrality_gnn_forward.4} parent=39 // loop_exit
                _
            $region40: #{centrality_gnn_forward.4} parent=31 // pred_fallthru
              _
          $region32: #{centrality_gnn_forward.4} parent=27 // pred_fallthru
            _
          %281 = vnop
        $region28: #{centrality_gnn_forward.4} parent=23 // pred_fallthru
          _
        // Predicated region
        $region66: #{centrality_gnn_forward.4} parent=23 // pred_check
          %p282 = pneg %p70
        $region67: #{centrality_gnn_forward.4} parent=23 // pred_check_branch
          %284 = sbr.rel (%p282) target = $region69
        $region68: #{centrality_gnn_forward.4} parent=23 // pred_region
          %s285 = smul.u32 16, %s18
          %p286 = scmp.lt.s32.totalorder %s285, 31
          %s287 = scalar_select %p286, %s285, 31
          %s288 = smul.addr %s287, 4
          %s289 = scalar_lea.vmem %s1, %s288
          %s290 = smul.u32 16, %s18
        $region69: #{centrality_gnn_forward.4} parent=23 // pred_fallthru
          _
      $region24: #{centrality_gnn_forward.4} parent=5 // pred_fallthru
        _
      %p291 = scmp.le.s32.totalorder 1, %s10
      %p292 = scmp.lt.s32.totalorder %s10, 5
      %p293 = pnand %p291, %p292
      %p294 = pneg %p293
      // Predicated region
      $region70: #{centrality_gnn_forward.4} parent=5 // pred_check
        _
      $region71: #{centrality_gnn_forward.4} parent=5 // pred_check_branch
        %296 = sbr.rel (%p293) target = $region73
      $region72: #{centrality_gnn_forward.4} parent=5 // pred_region
        %s297 = ssub.s32 %s10, 1
        %s298 = sand.u32 %s37, 1
        %s299 = sand.u32 %s37, 1
        %s300 = smul.addr %s299, 64
        %s301 = scalar_lea.vmem [#allocation3], %s300
        // Predicated region
        $region74: #{centrality_gnn_forward.4} parent=72 // pred_check
          %p302 = pneg %p50
        $region75: #{centrality_gnn_forward.4} parent=72 // pred_check_branch
          %304 = sbr.rel (%p302) target = $region77
        $region76: #{centrality_gnn_forward.4} parent=72 // pred_region
          _
        $region77: #{centrality_gnn_forward.4} parent=72 // pred_fallthru
          _
        %s305 = sand.u32 %s37, 1
        %s306 = sand.u32 %s37, 1
        %s307 = smul.addr %s306, 64
        %s308 = scalar_lea.vmem [#allocation3], %s307
        %p309 = pneg %p50
        %p310 = pneg %p47
        %s311 = smul.u32 16, %s20
        %p312 = scmp.lt.s32.totalorder %s311, 31
        %s313 = scalar_select %p312, %s311, 31
        %s314 = smul.addr %s313, 4
        %s315 = scalar_lea.vmem %s1, %s314
        %p316 = pneg %p76
        %p317 = pneg %p73
        %p318 = pneg %p97
        %p319 = pneg %p94
        %p320 = pneg %p118
        %p321 = pneg %p115
        %p322 = pneg %p144
        %p323 = pneg %p141
        %s324 = smul.u32 16, %s19
        %p325 = scmp.lt.s32.totalorder %s324, 31
        %s326 = scalar_select %p325, %s324, 31
        %s327 = smul.addr %s326, 4
        %s328 = scalar_lea.vmem %s4, %s327
        %s329 = smul.u32 16, %s19
        %s330 = smul.u32 16, %s20
        %p331 = scmp.lt.s32.totalorder %s330, 31
        %s332 = scalar_select %p331, %s330, 31
        %s333 = smul.addr %s332, 4
        %s334 = scalar_lea.vmem %s1, %s333
        %s335 = smul.u32 16, %s20
        %s336 = smul.u32 16, %s19
        %p337 = scmp.lt.s32.totalorder %s336, 31
        %s338 = scalar_select %p337, %s336, 31
        %s339 = smul.addr %s338, 4
        %s340 = scalar_lea.vmem %s4, %s339
        %s341 = smul.u32 16, %s19
        %p343 = scmp.eq.s32.totalorder %s20, 0
        // Predicated region
        $region78: #{centrality_gnn_forward.4} parent=72 // pred_check
          %p344 = pneg %p343
        $region79: #{centrality_gnn_forward.4} parent=72 // pred_check_branch
          %346 = sbr.rel (%p344) target = $region81
        $region80: #{centrality_gnn_forward.4} parent=72 // pred_region
          %vm347 = vcmask 261120
          %348 = vst.msk [vmem:[#allocation2] sm:$0xff] %vm347, 0.0
          %349 = vst.msk [vmem:[#allocation2 + $0x8] sm:$0xff] %vm347, 0.0
          %350 = vst.msk [vmem:[#allocation2 + $0x10] sm:$0xff] %vm347, 0.0
          %351 = vst.msk [vmem:[#allocation2 + $0x18] sm:$0xff] %vm347, 0.0
          %352 = vst.msk [vmem:[#allocation2 + $0x20] sm:$0xff] %vm347, 0.0
          %353 = vst.msk [vmem:[#allocation2 + $0x28] sm:$0xff] %vm347, 0.0
          %354 = vst.msk [vmem:[#allocation2 + $0x30] sm:$0xff] %vm347, 0.0
          %355 = vst.msk [vmem:[#allocation2 + $0x38] sm:$0xff] %vm347, 0.0
          %356 = vst.msk [vmem:[#allocation2 + $0x40] sm:$0xff] %vm347, 0.0
          %357 = vst.msk [vmem:[#allocation2 + $0x48] sm:$0xff] %vm347, 0.0
          %358 = vst.msk [vmem:[#allocation2 + $0x50] sm:$0xff] %vm347, 0.0
          %359 = vst.msk [vmem:[#allocation2 + $0x58] sm:$0xff] %vm347, 0.0
          %360 = vst.msk [vmem:[#allocation2 + $0x60] sm:$0xff] %vm347, 0.0
          %361 = vst.msk [vmem:[#allocation2 + $0x68] sm:$0xff] %vm347, 0.0
          %362 = vst.msk [vmem:[#allocation2 + $0x70] sm:$0xff] %vm347, 0.0
          %363 = vst.msk [vmem:[#allocation2 + $0x78] sm:$0xff] %vm347, 0.0
        $region81: #{centrality_gnn_forward.4} parent=72 // pred_fallthru
          _
        %v364 = vld [vmem:[%s334] sm:$0xf]
        %v365 = vld [vmem:[%s334 + $0x4] sm:$0xf]
        %v366 = vld [vmem:[%s334 + $0x8] sm:$0xf]
        %v367 = vld [vmem:[%s334 + $0xc] sm:$0xf]
        %v368 = vld [vmem:[%s334 + $0x10] sm:$0xf]
        %v369 = vld [vmem:[%s334 + $0x14] sm:$0xf]
        %v370 = vld [vmem:[%s334 + $0x18] sm:$0xf]
        %v371 = vld [vmem:[%s334 + $0x1c] sm:$0xf]
        %v372 = vld [vmem:[%s334 + $0x20] sm:$0xf]
        %v373 = vld [vmem:[%s334 + $0x24] sm:$0xf]
        %v374 = vld [vmem:[%s334 + $0x28] sm:$0xf]
        %v375 = vld [vmem:[%s334 + $0x2c] sm:$0xf]
        %v376 = vld [vmem:[%s334 + $0x30] sm:$0xf]
        %v377 = vld [vmem:[%s334 + $0x34] sm:$0xf]
        %v378 = vld [vmem:[%s334 + $0x38] sm:$0xf]
        %v379 = vld [vmem:[%s334 + $0x3c] sm:$0xf]
        %v380 = vld [vmem:[%s2] sm:$0xf]
        %v381 = vld [vmem:[%s2 + $0x4] sm:$0xf]
        %v382 = vld [vmem:[%s2 + $0x8] sm:$0xf]
        %v383 = vld [vmem:[%s2 + $0xc] sm:$0xf]
        %v400 = vunpack.c.l.b16 %v364
        %v401 = vunpack.c.l.b16 %v365
        %v402 = vunpack.c.l.b16 %v366
        %v403 = vunpack.c.l.b16 %v367
        %v404 = vunpack.c.l.b16 %v368
        %v405 = vunpack.c.l.b16 %v369
        %v406 = vunpack.c.l.b16 %v370
        %v407 = vunpack.c.l.b16 %v371
        %v408 = vunpack.c.l.b16 %v372
        %v409 = vunpack.c.l.b16 %v373
        %v410 = vunpack.c.l.b16 %v374
        %v411 = vunpack.c.l.b16 %v375
        %v412 = vunpack.c.l.b16 %v376
        %v413 = vunpack.c.l.b16 %v377
        %v414 = vunpack.c.l.b16 %v378
        %v415 = vunpack.c.l.b16 %v379
        %v416 = vpack.c.b16 %v401, %v400
        %v417 = vpack.c.b16 %v403, %v402
        %v418 = vpack.c.b16 %v405, %v404
        %v419 = vpack.c.b16 %v407, %v406
        %v420 = vpack.c.b16 %v409, %v408
        %v421 = vpack.c.b16 %v411, %v410
        %v422 = vpack.c.b16 %v413, %v412
        %v423 = vpack.c.b16 %v415, %v414
        %v428 = vunpack.c.l.b16 %v380
        %v429 = vunpack.c.l.b16 %v381
        %v430 = vunpack.c.l.b16 %v382
        %v431 = vunpack.c.l.b16 %v383
        %v432 = vpack.c.b16 %v429, %v428
        %v433 = vpack.c.b16 %v431, %v430
        %vm436 = vcmask 261120
        %v438 = vsel %vm436, %v416, 0
        %v441 = vsel %vm436, %v417, 0
        %v444 = vsel %vm436, %v418, 0
        %v447 = vsel %vm436, %v419, 0
        %v450 = vsel %vm436, %v420, 0
        %v453 = vsel %vm436, %v421, 0
        %v456 = vsel %vm436, %v422, 0
        %v459 = vsel %vm436, %v423, 0
        %461 = vmatprep.subr.bf16.mxu0 0
        %462 = vmatpush1.bf16.msra.mxu0 0
        %463 = vmatprep.subr.bf16.mxu0 0
        %464 = vmatpush1.bf16.msra.mxu0 0
        %465 = vmatprep.subr.bf16.mxu0 0
        %466 = vmatpush1.bf16.msra.mxu0 0
        %467 = vmatprep.subr.bf16.mxu0 0
        %468 = vmatpush1.bf16.msra.mxu0 0
        %469 = vmatprep.subr.bf16.mxu0 0
        %470 = vmatpush1.bf16.msra.mxu0 0
        %471 = vmatprep.subr.bf16.mxu0 0
        %472 = vmatpush1.bf16.msra.mxu0 0
        %473 = vmatprep.subr.bf16.mxu0 0
        %474 = vmatpush1.bf16.msra.mxu0 %v433
        %475 = vmatprep.subr.bf16.mxu0 0
        %476 = vmatpush1.bf16.msra.mxu0 %v432
        %477 = vmatprep.subr.bf16.mxu0 0
        %478 = vmatpush2.bf16.msra.mxu0 0
        %479 = vmatprep.subr.bf16.mxu0 0
        %480 = vmatpush2.bf16.msra.mxu0 0
        %481 = vmatprep.subr.bf16.mxu0 0
        %482 = vmatpush2.bf16.msra.mxu0 0
        %483 = vmatprep.subr.bf16.mxu0 0
        %484 = vmatpush2.bf16.msra.mxu0 0
        %485 = vmatprep.subr.bf16.mxu0 0
        %486 = vmatpush2.bf16.msra.mxu0 0
        %487 = vmatprep.subr.bf16.mxu0 0
        %488 = vmatpush2.bf16.msra.mxu0 0
        %489 = vmatprep.subr.bf16.mxu0 0
        %490 = vmatpush2.bf16.msra.mxu0 0
        %491 = vmatprep.subr.bf16.mxu0 0
        %492 = vmatpush2.bf16.msra.mxu0 0
        %493 = vmatprep.mubr.bf16.mxu0 0
        %494 = vmatmul.mubr.bf16.gmra.mxu0 %v438
        %v495 = vpop.f32.mrf.mxu0
        %v496 = vadd.f32 0.0, %v495
        %v497 = vpop.f32.mrf.mxu0
        %v498 = vpop.f32.mrf.mxu0
        %v499 = vadd.f32 0.0, %v498
        %v500 = vpop.f32.mrf.mxu0
        %501 = vmatprep.mubr.bf16.mxu0 0
        %502 = vmatmul.mubr.bf16.gmra.mxu0 %v441
        %v503 = vpop.f32.mrf.mxu0
        %v504 = vadd.f32 0.0, %v503
        %v505 = vpop.f32.mrf.mxu0
        %v506 = vpop.f32.mrf.mxu0
        %v507 = vadd.f32 0.0, %v506
        %v508 = vpop.f32.mrf.mxu0
        %509 = vmatprep.mubr.bf16.mxu0 0
        %510 = vmatmul.mubr.bf16.gmra.mxu0 %v444
        %v511 = vpop.f32.mrf.mxu0
        %v512 = vadd.f32 0.0, %v511
        %v513 = vpop.f32.mrf.mxu0
        %v514 = vpop.f32.mrf.mxu0
        %v515 = vadd.f32 0.0, %v514
        %v516 = vpop.f32.mrf.mxu0
        %517 = vmatprep.mubr.bf16.mxu0 0
        %518 = vmatmul.mubr.bf16.gmra.mxu0 %v447
        %v519 = vpop.f32.mrf.mxu0
        %v520 = vadd.f32 0.0, %v519
        %v521 = vpop.f32.mrf.mxu0
        %v522 = vpop.f32.mrf.mxu0
        %v523 = vadd.f32 0.0, %v522
        %v524 = vpop.f32.mrf.mxu0
        %525 = vmatprep.mubr.bf16.mxu0 0
        %526 = vmatmul.mubr.bf16.gmra.mxu0 %v450
        %v527 = vpop.f32.mrf.mxu0
        %v528 = vadd.f32 0.0, %v527
        %v529 = vpop.f32.mrf.mxu0
        %v530 = vpop.f32.mrf.mxu0
        %v531 = vadd.f32 0.0, %v530
        %v532 = vpop.f32.mrf.mxu0
        %533 = vmatprep.mubr.bf16.mxu0 0
        %534 = vmatmul.mubr.bf16.gmra.mxu0 %v453
        %v535 = vpop.f32.mrf.mxu0
        %v536 = vadd.f32 0.0, %v535
        %v537 = vpop.f32.mrf.mxu0
        %v538 = vpop.f32.mrf.mxu0
        %v539 = vadd.f32 0.0, %v538
        %v540 = vpop.f32.mrf.mxu0
        %541 = vmatprep.mubr.bf16.mxu0 0
        %542 = vmatmul.mubr.bf16.gmra.mxu0 %v456
        %v543 = vpop.f32.mrf.mxu0
        %v544 = vadd.f32 0.0, %v543
        %v545 = vpop.f32.mrf.mxu0
        %v546 = vpop.f32.mrf.mxu0
        %v547 = vadd.f32 0.0, %v546
        %v548 = vpop.f32.mrf.mxu0
        %549 = vmatprep.mubr.bf16.mxu0 0
        %550 = vmatmul.mubr.bf16.gmra.mxu0 %v459
        %v551 = vpop.f32.mrf.mxu0
        %v552 = vadd.f32 0.0, %v551
        %v553 = vpop.f32.mrf.mxu0
        %v554 = vpop.f32.mrf.mxu0
        %v555 = vadd.f32 0.0, %v554
        %v556 = vpop.f32.mrf.mxu0
        %557 = vdwg.mxu0
        %v558 = vld [vmem:[#allocation2] sm:$0xff]
        %v559 = vld [vmem:[#allocation2 + $0x8] sm:$0xff]
        %v560 = vld [vmem:[#allocation2 + $0x10] sm:$0xff]
        %v561 = vld [vmem:[#allocation2 + $0x18] sm:$0xff]
        %v562 = vld [vmem:[#allocation2 + $0x20] sm:$0xff]
        %v563 = vld [vmem:[#allocation2 + $0x28] sm:$0xff]
        %v564 = vld [vmem:[#allocation2 + $0x30] sm:$0xff]
        %v565 = vld [vmem:[#allocation2 + $0x38] sm:$0xff]
        %v566 = vld [vmem:[#allocation2 + $0x40] sm:$0xff]
        %v567 = vld [vmem:[#allocation2 + $0x48] sm:$0xff]
        %v568 = vld [vmem:[#allocation2 + $0x50] sm:$0xff]
        %v569 = vld [vmem:[#allocation2 + $0x58] sm:$0xff]
        %v570 = vld [vmem:[#allocation2 + $0x60] sm:$0xff]
        %v571 = vld [vmem:[#allocation2 + $0x68] sm:$0xff]
        %v572 = vld [vmem:[#allocation2 + $0x70] sm:$0xff]
        %v573 = vld [vmem:[#allocation2 + $0x78] sm:$0xff]
        %v574 = vld [vmem:[%s301] sm:$0xf]
        %v575 = vld [vmem:[%s301 + $0x4] sm:$0xf]
        %v576 = vld [vmem:[%s301 + $0x8] sm:$0xf]
        %v577 = vld [vmem:[%s301 + $0xc] sm:$0xf]
        %v578 = vld [vmem:[%s301 + $0x10] sm:$0xf]
        %v579 = vld [vmem:[%s301 + $0x14] sm:$0xf]
        %v580 = vld [vmem:[%s301 + $0x18] sm:$0xf]
        %v581 = vld [vmem:[%s301 + $0x1c] sm:$0xf]
        %v582 = vld [vmem:[%s301 + $0x20] sm:$0xf]
        %v583 = vld [vmem:[%s301 + $0x24] sm:$0xf]
        %v584 = vld [vmem:[%s301 + $0x28] sm:$0xf]
        %v585 = vld [vmem:[%s301 + $0x2c] sm:$0xf]
        %v586 = vld [vmem:[%s301 + $0x30] sm:$0xf]
        %v587 = vld [vmem:[%s301 + $0x34] sm:$0xf]
        %v588 = vld [vmem:[%s301 + $0x38] sm:$0xf]
        %v589 = vld [vmem:[%s301 + $0x3c] sm:$0xf]
        %v590 = vpack.c.bf16 %v499, %v496
        %v591 = vpack.c.bf16 %v507, %v504
        %v592 = vpack.c.bf16 %v515, %v512
        %v593 = vpack.c.bf16 %v523, %v520
        %v594 = vpack.c.bf16 %v531, %v528
        %v595 = vpack.c.bf16 %v539, %v536
        %v596 = vpack.c.bf16 %v547, %v544
        %v597 = vpack.c.bf16 %v555, %v552
        %v614 = vunpack.c.l.b16 %v574
        %v615 = vunpack.c.l.b16 %v575
        %v616 = vunpack.c.l.b16 %v576
        %v617 = vunpack.c.l.b16 %v577
        %v618 = vunpack.c.l.b16 %v578
        %v619 = vunpack.c.l.b16 %v579
        %v620 = vunpack.c.l.b16 %v580
        %v621 = vunpack.c.l.b16 %v581
        %v622 = vunpack.c.l.b16 %v582
        %v623 = vunpack.c.l.b16 %v583
        %v624 = vunpack.c.l.b16 %v584
        %v625 = vunpack.c.l.b16 %v585
        %v626 = vunpack.c.l.b16 %v586
        %v627 = vunpack.c.l.b16 %v587
        %v628 = vunpack.c.l.b16 %v588
        %v629 = vunpack.c.l.b16 %v589
        %v630 = vpack.c.b16 %v615, %v614
        %v631 = vpack.c.b16 %v617, %v616
        %v632 = vpack.c.b16 %v619, %v618
        %v633 = vpack.c.b16 %v621, %v620
        %v634 = vpack.c.b16 %v623, %v622
        %v635 = vpack.c.b16 %v625, %v624
        %v636 = vpack.c.b16 %v627, %v626
        %v637 = vpack.c.b16 %v629, %v628
        %646 = vmatprep.subr.bf16.mxu0 0
        %647 = vmatpush1.bf16.msra.mxu0 %v597
        %648 = vmatprep.subr.bf16.mxu0 0
        %649 = vmatpush1.bf16.msra.mxu0 %v596
        %650 = vmatprep.subr.bf16.mxu0 0
        %651 = vmatpush1.bf16.msra.mxu0 %v595
        %652 = vmatprep.subr.bf16.mxu0 0
        %653 = vmatpush1.bf16.msra.mxu0 %v594
        %654 = vmatprep.subr.bf16.mxu0 0
        %655 = vmatpush1.bf16.msra.mxu0 %v593
        %656 = vmatprep.subr.bf16.mxu0 0
        %657 = vmatpush1.bf16.msra.mxu0 %v592
        %658 = vmatprep.subr.bf16.mxu0 0
        %659 = vmatpush1.bf16.msra.mxu0 %v591
        %660 = vmatprep.subr.bf16.mxu0 0
        %661 = vmatpush1.bf16.msra.mxu0 %v590
        %662 = vmatprep.subr.bf16.mxu0 0
        %663 = vmatpush2.bf16.msra.mxu0 0
        %664 = vmatprep.subr.bf16.mxu0 0
        %665 = vmatpush2.bf16.msra.mxu0 0
        %666 = vmatprep.subr.bf16.mxu0 0
        %667 = vmatpush2.bf16.msra.mxu0 0
        %668 = vmatprep.subr.bf16.mxu0 0
        %669 = vmatpush2.bf16.msra.mxu0 0
        %670 = vmatprep.subr.bf16.mxu0 0
        %671 = vmatpush2.bf16.msra.mxu0 0
        %672 = vmatprep.subr.bf16.mxu0 0
        %673 = vmatpush2.bf16.msra.mxu0 0
        %674 = vmatprep.subr.bf16.mxu0 0
        %675 = vmatpush2.bf16.msra.mxu0 0
        %676 = vmatprep.subr.bf16.mxu0 0
        %677 = vmatpush2.bf16.msra.mxu0 0
        %678 = vmatprep.mubr.bf16.mxu0 0
        %679 = vmatmul.mubr.bf16.gmra.mxu0 %v630
        %v680 = vpop.f32.mrf.mxu0
        %v681 = vadd.f32 0.0, %v680
        %v682 = vpop.f32.mrf.mxu0
        %v683 = vpop.f32.mrf.mxu0
        %v684 = vadd.f32 0.0, %v683
        %v685 = vpop.f32.mrf.mxu0
        %686 = vmatprep.mubr.bf16.mxu0 0
        %687 = vmatmul.mubr.bf16.gmra.mxu0 %v631
        %v688 = vpop.f32.mrf.mxu0
        %v689 = vadd.f32 0.0, %v688
        %v690 = vpop.f32.mrf.mxu0
        %v691 = vpop.f32.mrf.mxu0
        %v692 = vadd.f32 0.0, %v691
        %v693 = vpop.f32.mrf.mxu0
        %694 = vmatprep.mubr.bf16.mxu0 0
        %695 = vmatmul.mubr.bf16.gmra.mxu0 %v632
        %v696 = vpop.f32.mrf.mxu0
        %v697 = vadd.f32 0.0, %v696
        %v698 = vpop.f32.mrf.mxu0
        %v699 = vpop.f32.mrf.mxu0
        %v700 = vadd.f32 0.0, %v699
        %v701 = vpop.f32.mrf.mxu0
        %702 = vmatprep.mubr.bf16.mxu0 0
        %703 = vmatmul.mubr.bf16.gmra.mxu0 %v633
        %v704 = vpop.f32.mrf.mxu0
        %v705 = vadd.f32 0.0, %v704
        %v706 = vpop.f32.mrf.mxu0
        %v707 = vpop.f32.mrf.mxu0
        %v708 = vadd.f32 0.0, %v707
        %v709 = vpop.f32.mrf.mxu0
        %710 = vmatprep.mubr.bf16.mxu0 0
        %711 = vmatmul.mubr.bf16.gmra.mxu0 %v634
        %v712 = vpop.f32.mrf.mxu0
        %v713 = vadd.f32 0.0, %v712
        %v714 = vpop.f32.mrf.mxu0
        %v715 = vpop.f32.mrf.mxu0
        %v716 = vadd.f32 0.0, %v715
        %v717 = vpop.f32.mrf.mxu0
        %718 = vmatprep.mubr.bf16.mxu0 0
        %719 = vmatmul.mubr.bf16.gmra.mxu0 %v635
        %v720 = vpop.f32.mrf.mxu0
        %v721 = vadd.f32 0.0, %v720
        %v722 = vpop.f32.mrf.mxu0
        %v723 = vpop.f32.mrf.mxu0
        %v724 = vadd.f32 0.0, %v723
        %v725 = vpop.f32.mrf.mxu0
        %726 = vmatprep.mubr.bf16.mxu0 0
        %727 = vmatmul.mubr.bf16.gmra.mxu0 %v636
        %v728 = vpop.f32.mrf.mxu0
        %v729 = vadd.f32 0.0, %v728
        %v730 = vpop.f32.mrf.mxu0
        %v731 = vpop.f32.mrf.mxu0
        %v732 = vadd.f32 0.0, %v731
        %v733 = vpop.f32.mrf.mxu0
        %734 = vmatprep.mubr.bf16.mxu0 0
        %735 = vmatmul.mubr.bf16.gmra.mxu0 %v637
        %v736 = vpop.f32.mrf.mxu0
        %v737 = vadd.f32 0.0, %v736
        %v738 = vpop.f32.mrf.mxu0
        %v739 = vpop.f32.mrf.mxu0
        %v740 = vadd.f32 0.0, %v739
        %v741 = vpop.f32.mrf.mxu0
        %742 = vdwg.mxu0
        %v743 = vadd.f32 %v558, %v681
        %v744 = vadd.f32 %v559, %v684
        %v745 = vadd.f32 %v560, %v689
        %v746 = vadd.f32 %v561, %v692
        %v747 = vadd.f32 %v562, %v697
        %v748 = vadd.f32 %v563, %v700
        %v749 = vadd.f32 %v564, %v705
        %v750 = vadd.f32 %v565, %v708
        %v751 = vadd.f32 %v566, %v713
        %v752 = vadd.f32 %v567, %v716
        %v753 = vadd.f32 %v568, %v721
        %v754 = vadd.f32 %v569, %v724
        %v755 = vadd.f32 %v570, %v729
        %v756 = vadd.f32 %v571, %v732
        %v757 = vadd.f32 %v572, %v737
        %v758 = vadd.f32 %v573, %v740
        %759 = vst.msk [vmem:[#allocation2] sm:$0xff] %vm436, %v743
        %760 = vst.msk [vmem:[#allocation2 + $0x8] sm:$0xff] %vm436, %v744
        %761 = vst.msk [vmem:[#allocation2 + $0x10] sm:$0xff] %vm436, %v745
        %762 = vst.msk [vmem:[#allocation2 + $0x18] sm:$0xff] %vm436, %v746
        %763 = vst.msk [vmem:[#allocation2 + $0x20] sm:$0xff] %vm436, %v747
        %764 = vst.msk [vmem:[#allocation2 + $0x28] sm:$0xff] %vm436, %v748
        %765 = vst.msk [vmem:[#allocation2 + $0x30] sm:$0xff] %vm436, %v749
        %766 = vst.msk [vmem:[#allocation2 + $0x38] sm:$0xff] %vm436, %v750
        %767 = vst.msk [vmem:[#allocation2 + $0x40] sm:$0xff] %vm436, %v751
        %768 = vst.msk [vmem:[#allocation2 + $0x48] sm:$0xff] %vm436, %v752
        %769 = vst.msk [vmem:[#allocation2 + $0x50] sm:$0xff] %vm436, %v753
        %770 = vst.msk [vmem:[#allocation2 + $0x58] sm:$0xff] %vm436, %v754
        %771 = vst.msk [vmem:[#allocation2 + $0x60] sm:$0xff] %vm436, %v755
        %772 = vst.msk [vmem:[#allocation2 + $0x68] sm:$0xff] %vm436, %v756
        %773 = vst.msk [vmem:[#allocation2 + $0x70] sm:$0xff] %vm436, %v757
        %774 = vst.msk [vmem:[#allocation2 + $0x78] sm:$0xff] %vm436, %v758
        %p775 = scmp.eq.s32.totalorder %s20, 1
        // Predicated region
        $region82: #{centrality_gnn_forward.4} parent=72 // pred_check
          %p776 = pneg %p775
        $region83: #{centrality_gnn_forward.4} parent=72 // pred_check_branch
          %778 = sbr.rel (%p776) target = $region85
        $region84: #{centrality_gnn_forward.4} parent=72 // pred_region
          %v779 = vld [vmem:[#allocation2] sm:$0xff]
          %v780 = vld [vmem:[#allocation2 + $0x8] sm:$0xff]
          %v781 = vld [vmem:[#allocation2 + $0x10] sm:$0xff]
          %v782 = vld [vmem:[#allocation2 + $0x18] sm:$0xff]
          %v783 = vld [vmem:[#allocation2 + $0x20] sm:$0xff]
          %v784 = vld [vmem:[#allocation2 + $0x28] sm:$0xff]
          %v785 = vld [vmem:[#allocation2 + $0x30] sm:$0xff]
          %v786 = vld [vmem:[#allocation2 + $0x38] sm:$0xff]
          %v787 = vld [vmem:[#allocation2 + $0x40] sm:$0xff]
          %v788 = vld [vmem:[#allocation2 + $0x48] sm:$0xff]
          %v789 = vld [vmem:[#allocation2 + $0x50] sm:$0xff]
          %v790 = vld [vmem:[#allocation2 + $0x58] sm:$0xff]
          %v791 = vld [vmem:[#allocation2 + $0x60] sm:$0xff]
          %v792 = vld [vmem:[#allocation2 + $0x68] sm:$0xff]
          %v793 = vld [vmem:[#allocation2 + $0x70] sm:$0xff]
          %v794 = vld [vmem:[#allocation2 + $0x78] sm:$0xff]
          %v795 = vld [vmem:[%s3] sm:$0x1]
          %v797 = vlaneseq
          %v798 = vshrl.u32 %v797, 7
          %v799 = vsub.s32 0, %v798
          %v800 = vrot.slane %v795, %v799
          %v802 = vadd.f32 %v779, %v800
          %v803 = vadd.f32 %v780, %v800
          %v804 = vadd.f32 %v781, %v800
          %v805 = vadd.f32 %v782, %v800
          %v806 = vadd.f32 %v783, %v800
          %v807 = vadd.f32 %v784, %v800
          %v808 = vadd.f32 %v785, %v800
          %v809 = vadd.f32 %v786, %v800
          %v810 = vadd.f32 %v787, %v800
          %v811 = vadd.f32 %v788, %v800
          %v812 = vadd.f32 %v789, %v800
          %v813 = vadd.f32 %v790, %v800
          %v814 = vadd.f32 %v791, %v800
          %v815 = vadd.f32 %v792, %v800
          %v816 = vadd.f32 %v793, %v800
          %v817 = vadd.f32 %v794, %v800
          %v818 = vmax.f32 %v802, 0.0
          %v819 = vmax.f32 %v803, 0.0
          %v820 = vmax.f32 %v804, 0.0
          %v821 = vmax.f32 %v805, 0.0
          %v822 = vmax.f32 %v806, 0.0
          %v823 = vmax.f32 %v807, 0.0
          %v824 = vmax.f32 %v808, 0.0
          %v825 = vmax.f32 %v809, 0.0
          %v826 = vmax.f32 %v810, 0.0
          %v827 = vmax.f32 %v811, 0.0
          %v828 = vmax.f32 %v812, 0.0
          %v829 = vmax.f32 %v813, 0.0
          %v830 = vmax.f32 %v814, 0.0
          %v831 = vmax.f32 %v815, 0.0
          %v832 = vmax.f32 %v816, 0.0
          %v833 = vmax.f32 %v817, 0.0
          %v834 = vpack.c.bf16 %v819, %v818
          %v835 = vpack.c.bf16 %v821, %v820
          %v836 = vpack.c.bf16 %v823, %v822
          %v837 = vpack.c.bf16 %v825, %v824
          %v838 = vpack.c.bf16 %v827, %v826
          %v839 = vpack.c.bf16 %v829, %v828
          %v840 = vpack.c.bf16 %v831, %v830
          %v841 = vpack.c.bf16 %v833, %v832
          %v850 = vunpack.c.l.b16 %v834
          %v851 = vunpack.c.h.b16 %v834
          %v852 = vunpack.c.l.b16 %v835
          %v853 = vunpack.c.h.b16 %v835
          %v854 = vunpack.c.l.b16 %v836
          %v855 = vunpack.c.h.b16 %v836
          %v856 = vunpack.c.l.b16 %v837
          %v857 = vunpack.c.h.b16 %v837
          %v858 = vunpack.c.l.b16 %v838
          %v859 = vunpack.c.h.b16 %v838
          %v860 = vunpack.c.l.b16 %v839
          %v861 = vunpack.c.h.b16 %v839
          %v862 = vunpack.c.l.b16 %v840
          %v863 = vunpack.c.h.b16 %v840
          %v864 = vunpack.c.l.b16 %v841
          %v865 = vunpack.c.h.b16 %v841
          %v866 = vpack.c.b16 %v850, %v850
          %v867 = vpack.c.b16 %v851, %v851
          %v868 = vpack.c.b16 %v852, %v852
          %v869 = vpack.c.b16 %v853, %v853
          %v870 = vpack.c.b16 %v854, %v854
          %v871 = vpack.c.b16 %v855, %v855
          %v872 = vpack.c.b16 %v856, %v856
          %v873 = vpack.c.b16 %v857, %v857
          %v874 = vpack.c.b16 %v858, %v858
          %v875 = vpack.c.b16 %v859, %v859
          %v876 = vpack.c.b16 %v860, %v860
          %v877 = vpack.c.b16 %v861, %v861
          %v878 = vpack.c.b16 %v862, %v862
          %v879 = vpack.c.b16 %v863, %v863
          %v880 = vpack.c.b16 %v864, %v864
          %v881 = vpack.c.b16 %v865, %v865
          %vm898 = vcmask 257024
          %899 = vst.msk [vmem:[%s340] sm:$0xf] %vm898, %v866
          %900 = vst.msk [vmem:[%s340 + $0x4] sm:$0xf] %vm898, %v867
          %901 = vst.msk [vmem:[%s340 + $0x8] sm:$0xf] %vm898, %v868
          %902 = vst.msk [vmem:[%s340 + $0xc] sm:$0xf] %vm898, %v869
          %903 = vst.msk [vmem:[%s340 + $0x10] sm:$0xf] %vm898, %v870
          %904 = vst.msk [vmem:[%s340 + $0x14] sm:$0xf] %vm898, %v871
          %905 = vst.msk [vmem:[%s340 + $0x18] sm:$0xf] %vm898, %v872
          %906 = vst.msk [vmem:[%s340 + $0x1c] sm:$0xf] %vm898, %v873
          %907 = vst.msk [vmem:[%s340 + $0x20] sm:$0xf] %vm898, %v874
          %908 = vst.msk [vmem:[%s340 + $0x24] sm:$0xf] %vm898, %v875
          %909 = vst.msk [vmem:[%s340 + $0x28] sm:$0xf] %vm898, %v876
          %910 = vst.msk [vmem:[%s340 + $0x2c] sm:$0xf] %vm898, %v877
          %911 = vst.msk [vmem:[%s340 + $0x30] sm:$0xf] %vm898, %v878
          %912 = vst.msk [vmem:[%s340 + $0x34] sm:$0xf] %vm898, %v879
          %913 = vst.msk [vmem:[%s340 + $0x38] sm:$0xf] %vm898, %v880
          %914 = vst.msk [vmem:[%s340 + $0x3c] sm:$0xf] %vm898, %v881
        $region85: #{centrality_gnn_forward.4} parent=72 // pred_fallthru
          _
        %s915 = smul.u32 16, %s19
        %p916 = scmp.lt.s32.totalorder %s915, 31
        %s917 = scalar_select %p916, %s915, 31
        %s918 = smul.addr %s917, 4
        %s919 = scalar_lea.vmem %s4, %s918
        // Predicated region
        $region86: #{centrality_gnn_forward.4} parent=72 // pred_check
          %p920 = pneg %p141
        $region87: #{centrality_gnn_forward.4} parent=72 // pred_check_branch
          %922 = sbr.rel (%p920) target = $region89
        $region88: #{centrality_gnn_forward.4} parent=72 // pred_region
          %s923 = smul.u32 16, %s19
        $region89: #{centrality_gnn_forward.4} parent=72 // pred_fallthru
          _
      $region73: #{centrality_gnn_forward.4} parent=5 // pred_fallthru
        _
      %p924 = scmp.le.s32.totalorder 2, %s10
      // Predicated region
      $region90: #{centrality_gnn_forward.4} parent=5 // pred_check
        %p925 = pneg %p924
      $region91: #{centrality_gnn_forward.4} parent=5 // pred_check_branch
        %927 = sbr.rel (%p925) target = $region93
      $region92: #{centrality_gnn_forward.4} parent=5 // pred_region
        %s928 = ssub.s32 %s10, 2
        // Predicated region
        $region94: #{centrality_gnn_forward.4} parent=92 // pred_check
          %p929 = pneg %p147
        $region95: #{centrality_gnn_forward.4} parent=92 // pred_check_branch
          %931 = sbr.rel (%p929) target = $region97
        $region96: #{centrality_gnn_forward.4} parent=92 // pred_region
          %s932 = smul.u32 16, %s21
          %p933 = scmp.lt.s32.totalorder %s932, 31
          %s934 = scalar_select %p933, %s932, 31
          %s935 = smul.addr %s934, 4
          %s936 = scalar_lea.vmem %s4, %s935
        $region97: #{centrality_gnn_forward.4} parent=92 // pred_fallthru
          _
      $region93: #{centrality_gnn_forward.4} parent=5 // pred_fallthru
        _
    $region6: #{centrality_gnn_forward.4} parent=1 // loop_footer
      %s14 = sadd.s32 1, %s10
    $region7: #{centrality_gnn_forward.4} parent=1 // loop_footer_branch
      %9 = sbr.rel target = $region3
    $region8: #{centrality_gnn_forward.4} parent=1 // loop_exit
      _

</llo_original>
